<compile_context>
chip_gen: v7x
topology: tpu7x:2x2x1
jax: 0.10.0
libtpu: 0.0.40
codegen_flags: <defaults>
</compile_context>

<pallas_src>
import functools

import jax
import jax.numpy as jnp
from jax import lax
from jax.experimental import pallas as pl
from jax.experimental.pallas import tpu as pltpu


def _round_up(x, m):
    return (x + m - 1) // m * m


# ---------------------------------------------------------------------------
# Fused Pallas kernel: whole TCN stack for one batch element.
# ---------------------------------------------------------------------------
def _fused_tcn_kernel(x_ref, w1_ref, b1_ref, w2_ref, b2_ref, wd_ref, bd_ref,
                      o_ref, act_ref, hid_ref,
                      *, T, K, CP, P, dilations, ds_index):
    """Shapes (channels-last, channels padded to CP = multiple of 128):

    x_ref : (1, T, CP)        bf16  input block
    w1_ref: (L, K*CP, CP)     bf16  conv1 weights, K taps stacked on contraction
    b1_ref: (L, 1, CP)        f32
    w2_ref: (L, K*CP, CP)     bf16  conv2 weights
    b2_ref: (L, 1, CP)        f32
    wd_ref: (Ld, CP, CP)      bf16  1x1 downsample (only layers that have one)
    bd_ref: (Ld, 1, CP)       f32
    o_ref : (1, T, CP)        bf16  output block (lane-dense store)
    act_ref: VMEM (P+T, CP)   f32   resident activation; rows [0:P) zero prefix
    hid_ref: VMEM (P+T, CP)   f32   conv1 staging; same zero prefix
    """
    L = len(dilations)

    # Zero the small causal prefix once (P rows, 8-aligned).  Rows [P:P+T) are
    # always rewritten below, so the prefix stays zero for every layer / tap.
    act_ref[0:P, :] = jnp.zeros((P, CP), jnp.float32)
    hid_ref[0:P, :] = jnp.zeros((P, CP), jnp.float32)

    # Load the input activation into the resident buffer.
    act_ref[P:P + T, :] = x_ref[0].astype(jnp.float32)

    def tap_operand(src_ref, d):
        # Concatenate the K causal taps along the contraction dim -> (T, K*CP)
        # so each conv is a single deep MXU dot.  The sublane shift of each tap
        # is paid once here (per conv), not per dot.
        taps = [src_ref[P - (K - 1 - i) * d: P - (K - 1 - i) * d + T, :]
                for i in range(K)]
        cat = taps[0] if K == 1 else jnp.concatenate(taps, axis=-1)
        return cat.astype(jnp.bfloat16)

    for l in range(L):            # L is small & static: unrolled layer loop
        d = dilations[l]

        # ---- conv1 (causal, dilated), bias + ReLU (dropout = identity) ----
        h1 = jnp.dot(tap_operand(act_ref, d), w1_ref[l],
                     preferred_element_type=jnp.float32)
        h1 = jnp.maximum(h1 + b1_ref[l], 0.0)
        hid_ref[P:P + T, :] = h1

        # ---- conv2 (causal, dilated), bias + ReLU (dropout = identity) ----
        out = jnp.dot(tap_operand(hid_ref, d), w2_ref[l],
                      preferred_element_type=jnp.float32)
        out = jnp.maximum(out + b2_ref[l], 0.0)

        # ---- residual path ----
        x_res = act_ref[P:P + T, :]
        if ds_index[l] >= 0:
            j = ds_index[l]
            res = jnp.dot(x_res.astype(jnp.bfloat16), wd_ref[j],
                          preferred_element_type=jnp.float32) + bd_ref[j]
        else:
            res = x_res

        y = jnp.maximum(out + res, 0.0)
        if l + 1 < L:
            act_ref[P:P + T, :] = y                  # feed the next block
        else:
            o_ref[0] = y.astype(o_ref.dtype)         # lane-dense bf16 store


# ---------------------------------------------------------------------------
# Wrapper: PyTorch NCW (B, C, T) in / out, full stack in one pallas_call.
# ---------------------------------------------------------------------------
def tcn_forward_pallas(x_nct, params, kernel_size):
    B, C_in, T = x_nct.shape
    L = len(params)
    K = kernel_size
    dilations = tuple(int(p["dilation"]) for p in params)
    channels = [C_in] + [int(p["w1"].shape[0]) for p in params]

    CP = _round_up(max(channels), 128)          # lane-dense channel padding
    Tp = _round_up(T, 8)                        # sublane-aligned time padding
    max_pad = (K - 1) * max(dilations)
    P = _round_up(max(max_pad, 1), 8)           # causal zero-prefix rows

    # channels-last, zero-pad (time tail + channels), cast to bf16 for HBM/MXU.
    x = jnp.transpose(x_nct, (0, 2, 1)).astype(jnp.float32)
    x = jnp.pad(x, ((0, 0), (0, Tp - T), (0, CP - C_in))).astype(jnp.bfloat16)

    w1s, b1s, w2s, b2s, wds, bds, ds_index = [], [], [], [], [], [], []
    for i, p in enumerate(params):
        c_in, c_out = channels[i], channels[i + 1]
        # (C_out, C_in, K) -> (K, C_in, C_out) -> pad -> (K*CP, CP) tap-stacked.
        w1 = jnp.pad(jnp.transpose(p["w1"], (2, 1, 0)),
                     ((0, 0), (0, CP - c_in), (0, CP - c_out))).reshape(K * CP, CP)
        w2 = jnp.pad(jnp.transpose(p["w2"], (2, 1, 0)),
                     ((0, 0), (0, CP - c_out), (0, CP - c_out))).reshape(K * CP, CP)
        b1 = jnp.pad(p["b1"], (0, CP - c_out))[None, :]
        b2 = jnp.pad(p["b2"], (0, CP - c_out))[None, :]
        w1s.append(w1); w2s.append(w2); b1s.append(b1); b2s.append(b2)
        if p["wd"] is not None:
            ds_index.append(len(wds))
            wds.append(jnp.pad(jnp.transpose(p["wd"], (1, 0)),
                               ((0, CP - c_in), (0, CP - c_out))))
            bds.append(jnp.pad(p["bd"], (0, CP - c_out))[None, :])
        else:
            ds_index.append(-1)

    if not wds:   # keep the kernel signature fixed when no layer downsamples
        wds = [jnp.zeros((CP, CP), jnp.float32)]
        bds = [jnp.zeros((1, CP), jnp.float32)]

    W1 = jnp.stack(w1s).astype(jnp.bfloat16)    # (L, K*CP, CP)
    W2 = jnp.stack(w2s).astype(jnp.bfloat16)    # (L, K*CP, CP)
    WD = jnp.stack(wds).astype(jnp.bfloat16)    # (Ld, CP, CP)
    B1 = jnp.stack(b1s).astype(jnp.float32)     # (L, 1, CP)
    B2 = jnp.stack(b2s).astype(jnp.float32)
    BD = jnp.stack(bds).astype(jnp.float32)
    Ld = WD.shape[0]

    kernel = functools.partial(
        _fused_tcn_kernel, T=Tp, K=K, CP=CP, P=P,
        dilations=dilations, ds_index=tuple(ds_index))

    weight_bytes = (W1.size + W2.size + WD.size) * 2 \
        + (B1.size + B2.size + BD.size) * 4

    def vmem_footprint(weight_bufs):
        act_blocks = 2 * (2 * Tp * CP * 2)          # x + out blocks, dbl-buffered
        scratch = 2 * (P + Tp) * CP * 4             # two f32 resident buffers
        return act_blocks + weight_bufs * weight_bytes + scratch

    flops = 2 * B * Tp * CP * sum(
        2 * K * CP + (CP if j >= 0 else 0) for j in ds_index)
    bytes_accessed = x.size * 2 + weight_bytes + B * Tp * CP * 2

    def build(weight_mode, weight_bufs):
        def wspec(shape):
            idx = lambda b, _n=len(shape): (0,) * _n
            if weight_mode is None:
                return pl.BlockSpec(shape, idx)
            return pl.BlockSpec(shape, idx, pipeline_mode=weight_mode)

        limit = int(min(max(2 * vmem_footprint(weight_bufs), 32 << 20),
                        100 << 20))
        return pl.pallas_call(
            kernel,
            out_shape=jax.ShapeDtypeStruct((B, Tp, CP), jnp.bfloat16),
            grid_spec=pltpu.PrefetchScalarGridSpec(
                num_scalar_prefetch=0,
                grid=(B,),
                in_specs=[
                    pl.BlockSpec((1, Tp, CP), lambda b: (b, 0, 0)),
                    wspec((L, K * CP, CP)),
                    wspec((L, 1, CP)),
                    wspec((L, K * CP, CP)),
                    wspec((L, 1, CP)),
                    wspec((Ld, CP, CP)),
                    wspec((Ld, 1, CP)),
                ],
                out_specs=pl.BlockSpec((1, Tp, CP), lambda b: (b, 0, 0)),
                scratch_shapes=[
                    pltpu.VMEM((P + Tp, CP), jnp.float32),   # resident activation
                    pltpu.VMEM((P + Tp, CP), jnp.float32),   # conv1 staging
                ],
            ),
            compiler_params=pltpu.CompilerParams(
                dimension_semantics=("parallel",),
                vmem_limit_bytes=limit),
            cost_estimate=pl.CostEstimate(
                flops=flops, transcendentals=0, bytes_accessed=bytes_accessed),
        )

    try:
        # Constant index_maps -> single-buffer the resident weight stacks.
        out = build(pl.Buffered(1), 1)(x, W1, B1, W2, B2, WD, BD)
    except Exception:
        # Fallback if this JAX build rejects single-buffered auto-pipelining.
        out = build(None, 2)(x, W1, B1, W2, B2, WD, BD)

    out = out[:, :T, :channels[-1]]                  # strip padding (in bf16)
    return jnp.transpose(out, (0, 2, 1)).astype(jnp.float32)   # PyTorch NCW


# ---------------------------------------------------------------------------
# Parameter construction (deterministic, synthetic; weight-norm applied here).
# ---------------------------------------------------------------------------
def _weight_normed(key, c_out, c_in, k):
    """Effective conv1d weight (c_out, c_in, k) = g * v / ||v||."""
    kv, _ = jax.random.split(key)
    v = jax.random.normal(kv, (c_out, c_in, k), jnp.float32) * 0.01
    g = jnp.linspace(0.5, 1.5, c_out, dtype=jnp.float32)
    norm = jnp.sqrt(jnp.sum(v * v, axis=(1, 2), keepdims=True)) + 1e-12
    return g[:, None, None] * v / norm


def init_tcn_params(key, num_inputs, num_channels, kernel_size):
    params = []
    for i, c_out in enumerate(num_channels):
        c_in = num_inputs if i == 0 else num_channels[i - 1]
        keys = jax.random.split(jax.random.fold_in(key, i), 6)
        w1 = _weight_normed(keys[0], c_out, c_in, kernel_size)
        b1 = jax.random.normal(keys[1], (c_out,), jnp.float32) * 0.1
        w2 = _weight_normed(keys[2], c_out, c_out, kernel_size)
        b2 = jax.random.normal(keys[3], (c_out,), jnp.float32) * 0.1
        if c_in != c_out:
            wd = jax.random.normal(keys[4], (c_out, c_in), jnp.float32) * 0.01
            bd = jax.random.normal(keys[5], (c_out,), jnp.float32) * 0.1
        else:
            wd, bd = None, None
        params.append(dict(w1=w1, b1=b1, w2=w2, b2=b2, wd=wd, bd=bd,
                           dilation=2 ** i))
    return params


# ---------------------------------------------------------------------------
# Pure-JAX f32 reference (mirrors PyTorch semantics) for verification.
# ---------------------------------------------------------------------------
def _conv1d_chomp_ref(x_nct, w_oik, b, dilation, pad):
    y = lax.conv_general_dilated(
        x_nct, w_oik, window_strides=(1,), padding=[(pad, pad)],
        rhs_dilation=(dilation,), dimension_numbers=("NCH", "OIH", "NCH"))
    y = y + b[None, :, None]
    return y[:, :, :x_nct.shape[2]]           # Chomp1d


def tcn_forward_ref(x_nct, params, kernel_size):
    x = x_nct.astype(jnp.float32)
    for p in params:
        pad = (kernel_size - 1) * p["dilation"]
        h = jax.nn.relu(_conv1d_chomp_ref(x, p["w1"], p["b1"], p["dilation"], pad))
        h = jax.nn.relu(_conv1d_chomp_ref(h, p["w2"], p["b2"], p["dilation"], pad))
        if p["wd"] is None:
            res = x
        else:
            res = jnp.einsum("nct,oc->not", x, p["wd"]) + p["bd"][None, :, None]
        x = jax.nn.relu(h + res)
    return x


if __name__ == "__main__":
    key = jax.random.PRNGKey(0)
    B, C_in, T = 2, 4, 16
    num_channels = (16, 16)       # block0 has 1x1 downsample, block1 identity residual
    kernel_size = 2

    kx, kp = jax.random.split(key)
    x = jax.random.normal(kx, (B, C_in, T), jnp.float32)   # PyTorch NCW layout
    params = init_tcn_params(kp, C_in, num_channels, kernel_size)

    out = jax.block_until_ready(tcn_forward_pallas(x, params, kernel_size))
    ref = jax.block_until_ready(tcn_forward_ref(x, params, kernel_size))

    assert out.shape == (B, num_channels[-1], T), out.shape
    max_err = float(jnp.max(jnp.abs(out - ref)))
    # bf16 matmul operands + bf16 output -> loose-but-safe tolerance vs f32 ref.
    assert jnp.allclose(out, ref, atol=5e-2, rtol=5e-2), max_err

    print("KERNEL_OK")
</pallas_src>

<mosaic_0001>
module attributes {stable_mosaic.version = 11 : i64} {
  func.func @_fused_tcn_kernel(%arg0: i32, %arg1: memref<1x16x128xbf16, #tpu.memory_space<vmem>>, %arg2: memref<2x256x128xbf16, #tpu.memory_space<vmem>>, %arg3: memref<2x1x128xf32, #tpu.memory_space<vmem>>, %arg4: memref<2x256x128xbf16, #tpu.memory_space<vmem>>, %arg5: memref<2x1x128xf32, #tpu.memory_space<vmem>>, %arg6: memref<1x128x128xbf16, #tpu.memory_space<vmem>>, %arg7: memref<1x1x128xf32, #tpu.memory_space<vmem>>, %arg8: memref<1x16x128xbf16, #tpu.memory_space<vmem>>, %arg9: memref<24x128xf32, #tpu.memory_space<vmem>>, %arg10: memref<24x128xf32, #tpu.memory_space<vmem>>) attributes {dimension_semantics = [#tpu.dimension_semantics<parallel>], iteration_bounds = array<i64: 2>, scalar_prefetch = 0 : i64, scratch_operands = 2 : i64, tpu.core_type = #tpu.core_type<tc>, window_params = [{transform_indices = @transform_0, window_bounds = array<i64: 1, 16, 128>}, {pipeline_mode = #tpu.pipeline_mode<synchronous>, transform_indices = @transform_1, window_bounds = array<i64: 2, 256, 128>}, {pipeline_mode = #tpu.pipeline_mode<synchronous>, transform_indices = @transform_2, window_bounds = array<i64: 2, 1, 128>}, {pipeline_mode = #tpu.pipeline_mode<synchronous>, transform_indices = @transform_3, window_bounds = array<i64: 2, 256, 128>}, {pipeline_mode = #tpu.pipeline_mode<synchronous>, transform_indices = @transform_4, window_bounds = array<i64: 2, 1, 128>}, {pipeline_mode = #tpu.pipeline_mode<synchronous>, transform_indices = @transform_5, window_bounds = array<i64: 1, 128, 128>}, {pipeline_mode = #tpu.pipeline_mode<synchronous>, transform_indices = @transform_6, window_bounds = array<i64: 1, 1, 128>}, {transform_indices = @transform_7, window_bounds = array<i64: 1, 16, 128>}]} {
    %cst = arith.constant 0.000000e+00 : f32
    %0 = vector.broadcast %cst : f32 to vector<8x128xf32>
    %c0 = arith.constant 0 : index
    %c0_0 = arith.constant 0 : index
    %1 = vector.load %arg9[%c0, %c0_0] : memref<24x128xf32, #tpu.memory_space<vmem>>, vector<8x128xf32>
    tpu.vector_store %arg9[%c0, %c0_0], %0 {strides = array<i32>} : memref<24x128xf32, #tpu.memory_space<vmem>>, vector<8x128xf32>,
    %cst_1 = arith.constant 0.000000e+00 : f32
    %2 = vector.broadcast %cst_1 : f32 to vector<8x128xf32>
    %c0_2 = arith.constant 0 : index
    %c0_3 = arith.constant 0 : index
    %3 = vector.load %arg10[%c0_2, %c0_3] : memref<24x128xf32, #tpu.memory_space<vmem>>, vector<8x128xf32>
    tpu.vector_store %arg10[%c0_2, %c0_3], %2 {strides = array<i32>} : memref<24x128xf32, #tpu.memory_space<vmem>>, vector<8x128xf32>,
    %c0_4 = arith.constant 0 : index
    %c0_5 = arith.constant 0 : index
    %c0_6 = arith.constant 0 : index
    %4 = vector.load %arg1[%c0_4, %c0_5, %c0_6] : memref<1x16x128xbf16, #tpu.memory_space<vmem>>, vector<1x16x128xbf16>
    %5 = vector.shape_cast %4 : vector<1x16x128xbf16> to vector<16x128xbf16>
    %6 = arith.extf %5 : vector<16x128xbf16> to vector<16x128xf32>
    %c8 = arith.constant 8 : index
    %c0_7 = arith.constant 0 : index
    %7 = vector.load %arg9[%c8, %c0_7] : memref<24x128xf32, #tpu.memory_space<vmem>>, vector<16x128xf32>
    tpu.vector_store %arg9[%c8, %c0_7], %6 {strides = array<i32>} : memref<24x128xf32, #tpu.memory_space<vmem>>, vector<16x128xf32>,
    %c7 = arith.constant 7 : index
    %c0_8 = arith.constant 0 : index
    %8 = vector.load %arg9[%c7, %c0_8] : memref<24x128xf32, #tpu.memory_space<vmem>>, vector<16x128xf32>
    %c8_9 = arith.constant 8 : index
    %c0_10 = arith.constant 0 : index
    %9 = vector.load %arg9[%c8_9, %c0_10] : memref<24x128xf32, #tpu.memory_space<vmem>>, vector<16x128xf32>
    %10 = tpu.concatenate %8, %9 in 1 : vector<16x128xf32>, vector<16x128xf32> -> vector<16x256xf32>
    %11 = arith.truncf %10 : vector<16x256xf32> to vector<16x256xbf16>
    %c0_11 = arith.constant 0 : index
    %c0_12 = arith.constant 0 : index
    %c0_13 = arith.constant 0 : index
    %12 = vector.load %arg2[%c0_11, %c0_12, %c0_13] : memref<2x256x128xbf16, #tpu.memory_space<vmem>>, vector<1x256x128xbf16>
    %13 = vector.shape_cast %12 : vector<1x256x128xbf16> to vector<256x128xbf16>
    %cst_14 = arith.constant dense<0.000000e+00> : vector<16x128xf32>
    %14 = tpu.matmul %11, %13, %cst_14 {dimension_numbers = #tpu.dot_dimension_numbers<[1], [0], [0], [1], [0, 0, 1, 1], [], []>} : vector<16x256xbf16>, vector<256x128xbf16>, vector<16x128xf32> -> vector<16x128xf32>
    %c0_15 = arith.constant 0 : index
    %c0_16 = arith.constant 0 : index
    %c0_17 = arith.constant 0 : index
    %15 = vector.load %arg3[%c0_15, %c0_16, %c0_17] : memref<2x1x128xf32, #tpu.memory_space<vmem>>, vector<1x1x128xf32>
    %16 = vector.shape_cast %15 : vector<1x1x128xf32> to vector<1x128xf32>
    %17 = vector.broadcast %16 : vector<1x128xf32> to vector<16x128xf32>
    %18 = arith.addf %14, %17 : vector<16x128xf32>
    %cst_18 = arith.constant 0.000000e+00 : f32
    %19 = vector.broadcast %cst_18 : f32 to vector<16x128xf32>
    %20 = arith.maximumf %18, %19 : vector<16x128xf32>
    %c8_19 = arith.constant 8 : index
    %c0_20 = arith.constant 0 : index
    %21 = vector.load %arg10[%c8_19, %c0_20] : memref<24x128xf32, #tpu.memory_space<vmem>>, vector<16x128xf32>
    tpu.vector_store %arg10[%c8_19, %c0_20], %20 {strides = array<i32>} : memref<24x128xf32, #tpu.memory_space<vmem>>, vector<16x128xf32>,
    %c7_21 = arith.constant 7 : index
    %c0_22 = arith.constant 0 : index
    %22 = vector.load %arg10[%c7_21, %c0_22] : memref<24x128xf32, #tpu.memory_space<vmem>>, vector<16x128xf32>
    %c8_23 = arith.constant 8 : index
    %c0_24 = arith.constant 0 : index
    %23 = vector.load %arg10[%c8_23, %c0_24] : memref<24x128xf32, #tpu.memory_space<vmem>>, vector<16x128xf32>
    %24 = tpu.concatenate %22, %23 in 1 : vector<16x128xf32>, vector<16x128xf32> -> vector<16x256xf32>
    %25 = arith.truncf %24 : vector<16x256xf32> to vector<16x256xbf16>
    %c0_25 = arith.constant 0 : index
    %c0_26 = arith.constant 0 : index
    %c0_27 = arith.constant 0 : index
    %26 = vector.load %arg4[%c0_25, %c0_26, %c0_27] : memref<2x256x128xbf16, #tpu.memory_space<vmem>>, vector<1x256x128xbf16>
    %27 = vector.shape_cast %26 : vector<1x256x128xbf16> to vector<256x128xbf16>
    %cst_28 = arith.constant dense<0.000000e+00> : vector<16x128xf32>
    %28 = tpu.matmul %25, %27, %cst_28 {dimension_numbers = #tpu.dot_dimension_numbers<[1], [0], [0], [1], [0, 0, 1, 1], [], []>} : vector<16x256xbf16>, vector<256x128xbf16>, vector<16x128xf32> -> vector<16x128xf32>
    %c0_29 = arith.constant 0 : index
    %c0_30 = arith.constant 0 : index
    %c0_31 = arith.constant 0 : index
    %29 = vector.load %arg5[%c0_29, %c0_30, %c0_31] : memref<2x1x128xf32, #tpu.memory_space<vmem>>, vector<1x1x128xf32>
    %30 = vector.shape_cast %29 : vector<1x1x128xf32> to vector<1x128xf32>
    %31 = vector.broadcast %30 : vector<1x128xf32> to vector<16x128xf32>
    %32 = arith.addf %28, %31 : vector<16x128xf32>
    %cst_32 = arith.constant 0.000000e+00 : f32
    %33 = vector.broadcast %cst_32 : f32 to vector<16x128xf32>
    %34 = arith.maximumf %32, %33 : vector<16x128xf32>
    %c8_33 = arith.constant 8 : index
    %c0_34 = arith.constant 0 : index
    %35 = vector.load %arg9[%c8_33, %c0_34] : memref<24x128xf32, #tpu.memory_space<vmem>>, vector<16x128xf32>
    %36 = arith.truncf %35 : vector<16x128xf32> to vector<16x128xbf16>
    %c0_35 = arith.constant 0 : index
    %c0_36 = arith.constant 0 : index
    %c0_37 = arith.constant 0 : index
    %37 = vector.load %arg6[%c0_35, %c0_36, %c0_37] : memref<1x128x128xbf16, #tpu.memory_space<vmem>>, vector<1x128x128xbf16>
    %38 = vector.shape_cast %37 : vector<1x128x128xbf16> to vector<128x128xbf16>
    %cst_38 = arith.constant dense<0.000000e+00> : vector<16x128xf32>
    %39 = tpu.matmul %36, %38, %cst_38 {dimension_numbers = #tpu.dot_dimension_numbers<[1], [0], [0], [1], [0, 0, 1, 1], [], []>} : vector<16x128xbf16>, vector<128x128xbf16>, vector<16x128xf32> -> vector<16x128xf32>
    %c0_39 = arith.constant 0 : index
    %c0_40 = arith.constant 0 : index
    %c0_41 = arith.constant 0 : index
    %40 = vector.load %arg7[%c0_39, %c0_40, %c0_41] : memref<1x1x128xf32, #tpu.memory_space<vmem>>, vector<1x1x128xf32>
    %41 = vector.shape_cast %40 : vector<1x1x128xf32> to vector<1x128xf32>
    %42 = vector.broadcast %41 : vector<1x128xf32> to vector<16x128xf32>
    %43 = arith.addf %39, %42 : vector<16x128xf32>
    %44 = arith.addf %34, %43 : vector<16x128xf32>
    %cst_42 = arith.constant 0.000000e+00 : f32
    %45 = vector.broadcast %cst_42 : f32 to vector<16x128xf32>
    %46 = arith.maximumf %44, %45 : vector<16x128xf32>
    %c8_43 = arith.constant 8 : index
    %c0_44 = arith.constant 0 : index
    %47 = vector.load %arg9[%c8_43, %c0_44] : memref<24x128xf32, #tpu.memory_space<vmem>>, vector<16x128xf32>
    tpu.vector_store %arg9[%c8_43, %c0_44], %46 {strides = array<i32>} : memref<24x128xf32, #tpu.memory_space<vmem>>, vector<16x128xf32>,
    %c6 = arith.constant 6 : index
    %c0_45 = arith.constant 0 : index
    %48 = vector.load %arg9[%c6, %c0_45] : memref<24x128xf32, #tpu.memory_space<vmem>>, vector<16x128xf32>
    %c8_46 = arith.constant 8 : index
    %c0_47 = arith.constant 0 : index
    %49 = vector.load %arg9[%c8_46, %c0_47] : memref<24x128xf32, #tpu.memory_space<vmem>>, vector<16x128xf32>
    %50 = tpu.concatenate %48, %49 in 1 : vector<16x128xf32>, vector<16x128xf32> -> vector<16x256xf32>
    %51 = arith.truncf %50 : vector<16x256xf32> to vector<16x256xbf16>
    %c1 = arith.constant 1 : index
    %c0_48 = arith.constant 0 : index
    %c0_49 = arith.constant 0 : index
    %52 = vector.load %arg2[%c1, %c0_48, %c0_49] : memref<2x256x128xbf16, #tpu.memory_space<vmem>>, vector<1x256x128xbf16>
    %53 = vector.shape_cast %52 : vector<1x256x128xbf16> to vector<256x128xbf16>
    %cst_50 = arith.constant dense<0.000000e+00> : vector<16x128xf32>
    %54 = tpu.matmul %51, %53, %cst_50 {dimension_numbers = #tpu.dot_dimension_numbers<[1], [0], [0], [1], [0, 0, 1, 1], [], []>} : vector<16x256xbf16>, vector<256x128xbf16>, vector<16x128xf32> -> vector<16x128xf32>
    %c1_51 = arith.constant 1 : index
    %c0_52 = arith.constant 0 : index
    %c0_53 = arith.constant 0 : index
    %55 = vector.load %arg3[%c1_51, %c0_52, %c0_53] : memref<2x1x128xf32, #tpu.memory_space<vmem>>, vector<1x1x128xf32>
    %56 = vector.shape_cast %55 : vector<1x1x128xf32> to vector<1x128xf32>
    %57 = vector.broadcast %56 : vector<1x128xf32> to vector<16x128xf32>
    %58 = arith.addf %54, %57 : vector<16x128xf32>
    %cst_54 = arith.constant 0.000000e+00 : f32
    %59 = vector.broadcast %cst_54 : f32 to vector<16x128xf32>
    %60 = arith.maximumf %58, %59 : vector<16x128xf32>
    %c8_55 = arith.constant 8 : index
    %c0_56 = arith.constant 0 : index
    %61 = vector.load %arg10[%c8_55, %c0_56] : memref<24x128xf32, #tpu.memory_space<vmem>>, vector<16x128xf32>
    tpu.vector_store %arg10[%c8_55, %c0_56], %60 {strides = array<i32>} : memref<24x128xf32, #tpu.memory_space<vmem>>, vector<16x128xf32>,
    %c6_57 = arith.constant 6 : index
    %c0_58 = arith.constant 0 : index
    %62 = vector.load %arg10[%c6_57, %c0_58] : memref<24x128xf32, #tpu.memory_space<vmem>>, vector<16x128xf32>
    %c8_59 = arith.constant 8 : index
    %c0_60 = arith.constant 0 : index
    %63 = vector.load %arg10[%c8_59, %c0_60] : memref<24x128xf32, #tpu.memory_space<vmem>>, vector<16x128xf32>
    %64 = tpu.concatenate %62, %63 in 1 : vector<16x128xf32>, vector<16x128xf32> -> vector<16x256xf32>
    %65 = arith.truncf %64 : vector<16x256xf32> to vector<16x256xbf16>
    %c1_61 = arith.constant 1 : index
    %c0_62 = arith.constant 0 : index
    %c0_63 = arith.constant 0 : index
    %66 = vector.load %arg4[%c1_61, %c0_62, %c0_63] : memref<2x256x128xbf16, #tpu.memory_space<vmem>>, vector<1x256x128xbf16>
    %67 = vector.shape_cast %66 : vector<1x256x128xbf16> to vector<256x128xbf16>
    %cst_64 = arith.constant dense<0.000000e+00> : vector<16x128xf32>
    %68 = tpu.matmul %65, %67, %cst_64 {dimension_numbers = #tpu.dot_dimension_numbers<[1], [0], [0], [1], [0, 0, 1, 1], [], []>} : vector<16x256xbf16>, vector<256x128xbf16>, vector<16x128xf32> -> vector<16x128xf32>
    %c1_65 = arith.constant 1 : index
    %c0_66 = arith.constant 0 : index
    %c0_67 = arith.constant 0 : index
    %69 = vector.load %arg5[%c1_65, %c0_66, %c0_67] : memref<2x1x128xf32, #tpu.memory_space<vmem>>, vector<1x1x128xf32>
    %70 = vector.shape_cast %69 : vector<1x1x128xf32> to vector<1x128xf32>
    %71 = vector.broadcast %70 : vector<1x128xf32> to vector<16x128xf32>
    %72 = arith.addf %68, %71 : vector<16x128xf32>
    %cst_68 = arith.constant 0.000000e+00 : f32
    %73 = vector.broadcast %cst_68 : f32 to vector<16x128xf32>
    %74 = arith.maximumf %72, %73 : vector<16x128xf32>
    %c8_69 = arith.constant 8 : index
    %c0_70 = arith.constant 0 : index
    %75 = vector.load %arg9[%c8_69, %c0_70] : memref<24x128xf32, #tpu.memory_space<vmem>>, vector<16x128xf32>
    %76 = arith.addf %74, %75 : vector<16x128xf32>
    %cst_71 = arith.constant 0.000000e+00 : f32
    %77 = vector.broadcast %cst_71 : f32 to vector<16x128xf32>
    %78 = arith.maximumf %76, %77 : vector<16x128xf32>
    %79 = arith.truncf %78 : vector<16x128xf32> to vector<16x128xbf16>
    %c0_72 = arith.constant 0 : index
    %c0_73 = arith.constant 0 : index
    %c0_74 = arith.constant 0 : index
    %80 = vector.load %arg8[%c0_72, %c0_73, %c0_74] : memref<1x16x128xbf16, #tpu.memory_space<vmem>>, vector<1x16x128xbf16>
    %81 = vector.shape_cast %80 : vector<1x16x128xbf16> to vector<16x128xbf16>
    %82 = vector.shape_cast %79 : vector<16x128xbf16> to vector<1x16x128xbf16>
    tpu.vector_store %arg8[%c0_72, %c0_73, %c0_74], %82 {strides = array<i32>} : memref<1x16x128xbf16, #tpu.memory_space<vmem>>, vector<1x16x128xbf16>,
    return
  }
  func.func @transform_0(%arg0: i32) -> (i32, i32, i32) {
    %c0_i32 = arith.constant 0 : i32
    %c0_i32_0 = arith.constant 0 : i32
    %c0_i32_1 = arith.constant 0 : i32
    return %arg0, %c0_i32, %c0_i32_0 : i32, i32, i32
  }
  func.func @transform_1(%arg0: i32) -> (i32, i32, i32) {
    %c0_i32 = arith.constant 0 : i32
    %c0_i32_0 = arith.constant 0 : i32
    %c0_i32_1 = arith.constant 0 : i32
    %c0_i32_2 = arith.constant 0 : i32
    return %c0_i32, %c0_i32_0, %c0_i32_1 : i32, i32, i32
  }
  func.func @transform_2(%arg0: i32) -> (i32, i32, i32) {
    %c0_i32 = arith.constant 0 : i32
    %c0_i32_0 = arith.constant 0 : i32
    %c0_i32_1 = arith.constant 0 : i32
    %c0_i32_2 = arith.constant 0 : i32
    return %c0_i32, %c0_i32_0, %c0_i32_1 : i32, i32, i32
  }
  func.func @transform_3(%arg0: i32) -> (i32, i32, i32) {
    %c0_i32 = arith.constant 0 : i32
    %c0_i32_0 = arith.constant 0 : i32
    %c0_i32_1 = arith.constant 0 : i32
    %c0_i32_2 = arith.constant 0 : i32
    return %c0_i32, %c0_i32_0, %c0_i32_1 : i32, i32, i32
  }
  func.func @transform_4(%arg0: i32) -> (i32, i32, i32) {
    %c0_i32 = arith.constant 0 : i32
    %c0_i32_0 = arith.constant 0 : i32
    %c0_i32_1 = arith.constant 0 : i32
    %c0_i32_2 = arith.constant 0 : i32
    return %c0_i32, %c0_i32_0, %c0_i32_1 : i32, i32, i32
  }
  func.func @transform_5(%arg0: i32) -> (i32, i32, i32) {
    %c0_i32 = arith.constant 0 : i32
    %c0_i32_0 = arith.constant 0 : i32
    %c0_i32_1 = arith.constant 0 : i32
    %c0_i32_2 = arith.constant 0 : i32
    return %c0_i32, %c0_i32_0, %c0_i32_1 : i32, i32, i32
  }
  func.func @transform_6(%arg0: i32) -> (i32, i32, i32) {
    %c0_i32 = arith.constant 0 : i32
    %c0_i32_0 = arith.constant 0 : i32
    %c0_i32_1 = arith.constant 0 : i32
    %c0_i32_2 = arith.constant 0 : i32
    return %c0_i32, %c0_i32_0, %c0_i32_1 : i32, i32, i32
  }
  func.func @transform_7(%arg0: i32) -> (i32, i32, i32) {
    %c0_i32 = arith.constant 0 : i32
    %c0_i32_0 = arith.constant 0 : i32
    %c0_i32_1 = arith.constant 0 : i32
    return %arg0, %c0_i32, %c0_i32_0 : i32, i32, i32
  }
}

module attributes {stable_mosaic.version = 11 : i64} {
  func.func @_fused_tcn_kernel(%arg0: i32, %arg1: memref<1x16x128xbf16, #tpu.memory_space<vmem>>, %arg2: memref<2x256x128xbf16, #tpu.memory_space<vmem>>, %arg3: memref<2x1x128xf32, #tpu.memory_space<vmem>>, %arg4: memref<2x256x128xbf16, #tpu.memory_space<vmem>>, %arg5: memref<2x1x128xf32, #tpu.memory_space<vmem>>, %arg6: memref<1x128x128xbf16, #tpu.memory_space<vmem>>, %arg7: memref<1x1x128xf32, #tpu.memory_space<vmem>>, %arg8: memref<1x16x128xbf16, #tpu.memory_space<vmem>>, %arg9: memref<24x128xf32, #tpu.memory_space<vmem>>, %arg10: memref<24x128xf32, #tpu.memory_space<vmem>>) attributes {dimension_semantics = [#tpu.dimension_semantics<parallel>], iteration_bounds = array<i64: 2>, scalar_prefetch = 0 : i64, scratch_operands = 2 : i64, tpu.core_type = #tpu.core_type<tc>, window_params = [{transform_indices = @transform_0, window_bounds = array<i64: 1, 16, 128>}, {pipeline_mode = #tpu.pipeline_mode<synchronous>, transform_indices = @transform_1, window_bounds = array<i64: 2, 256, 128>}, {pipeline_mode = #tpu.pipeline_mode<synchronous>, transform_indices = @transform_2, window_bounds = array<i64: 2, 1, 128>}, {pipeline_mode = #tpu.pipeline_mode<synchronous>, transform_indices = @transform_3, window_bounds = array<i64: 2, 256, 128>}, {pipeline_mode = #tpu.pipeline_mode<synchronous>, transform_indices = @transform_4, window_bounds = array<i64: 2, 1, 128>}, {pipeline_mode = #tpu.pipeline_mode<synchronous>, transform_indices = @transform_5, window_bounds = array<i64: 1, 128, 128>}, {pipeline_mode = #tpu.pipeline_mode<synchronous>, transform_indices = @transform_6, window_bounds = array<i64: 1, 1, 128>}, {transform_indices = @transform_7, window_bounds = array<i64: 1, 16, 128>}]} {
    %cst = arith.constant 0.000000e+00 : f32
    %0 = vector.broadcast %cst : f32 to vector<8x128xf32>
    %c0 = arith.constant 0 : index
    %c0_0 = arith.constant 0 : index
    %1 = vector.load %arg9[%c0, %c0_0] : memref<24x128xf32, #tpu.memory_space<vmem>>, vector<8x128xf32>
    tpu.vector_store %arg9[%c0, %c0_0], %0 {strides = array<i32>} : memref<24x128xf32, #tpu.memory_space<vmem>>, vector<8x128xf32>,
    %cst_1 = arith.constant 0.000000e+00 : f32
    %2 = vector.broadcast %cst_1 : f32 to vector<8x128xf32>
    %c0_2 = arith.constant 0 : index
    %c0_3 = arith.constant 0 : index
    %3 = vector.load %arg10[%c0_2, %c0_3] : memref<24x128xf32, #tpu.memory_space<vmem>>, vector<8x128xf32>
    tpu.vector_store %arg10[%c0_2, %c0_3], %2 {strides = array<i32>} : memref<24x128xf32, #tpu.memory_space<vmem>>, vector<8x128xf32>,
    %c0_4 = arith.constant 0 : index
    %c0_5 = arith.constant 0 : index
    %c0_6 = arith.constant 0 : index
    %4 = vector.load %arg1[%c0_4, %c0_5, %c0_6] : memref<1x16x128xbf16, #tpu.memory_space<vmem>>, vector<1x16x128xbf16>
    %5 = vector.shape_cast %4 : vector<1x16x128xbf16> to vector<16x128xbf16>
    %6 = arith.extf %5 : vector<16x128xbf16> to vector<16x128xf32>
    %c8 = arith.constant 8 : index
    %c0_7 = arith.constant 0 : index
    %7 = vector.load %arg9[%c8, %c0_7] : memref<24x128xf32, #tpu.memory_space<vmem>>, vector<16x128xf32>
    tpu.vector_store %arg9[%c8, %c0_7], %6 {strides = array<i32>} : memref<24x128xf32, #tpu.memory_space<vmem>>, vector<16x128xf32>,
    %c7 = arith.constant 7 : index
    %c0_8 = arith.constant 0 : index
    %8 = vector.load %arg9[%c7, %c0_8] : memref<24x128xf32, #tpu.memory_space<vmem>>, vector<16x128xf32>
    %c8_9 = arith.constant 8 : index
    %c0_10 = arith.constant 0 : index
    %9 = vector.load %arg9[%c8_9, %c0_10] : memref<24x128xf32, #tpu.memory_space<vmem>>, vector<16x128xf32>
    %10 = tpu.concatenate %8, %9 in 1 : vector<16x128xf32>, vector<16x128xf32> -> vector<16x256xf32>
    %11 = arith.truncf %10 : vector<16x256xf32> to vector<16x256xbf16>
    %c0_11 = arith.constant 0 : index
    %c0_12 = arith.constant 0 : index
    %c0_13 = arith.constant 0 : index
    %12 = vector.load %arg2[%c0_11, %c0_12, %c0_13] : memref<2x256x128xbf16, #tpu.memory_space<vmem>>, vector<1x256x128xbf16>
    %13 = vector.shape_cast %12 : vector<1x256x128xbf16> to vector<256x128xbf16>
    %cst_14 = arith.constant dense<0.000000e+00> : vector<16x128xf32>
    %14 = tpu.matmul %11, %13, %cst_14 {dimension_numbers = #tpu.dot_dimension_numbers<[1], [0], [0], [1], [0, 0, 1, 1], [], []>} : vector<16x256xbf16>, vector<256x128xbf16>, vector<16x128xf32> -> vector<16x128xf32>
    %c0_15 = arith.constant 0 : index
    %c0_16 = arith.constant 0 : index
    %c0_17 = arith.constant 0 : index
    %15 = vector.load %arg3[%c0_15, %c0_16, %c0_17] : memref<2x1x128xf32, #tpu.memory_space<vmem>>, vector<1x1x128xf32>
    %16 = vector.shape_cast %15 : vector<1x1x128xf32> to vector<1x128xf32>
    %17 = vector.broadcast %16 : vector<1x128xf32> to vector<16x128xf32>
    %18 = arith.addf %14, %17 : vector<16x128xf32>
    %cst_18 = arith.constant 0.000000e+00 : f32
    %19 = vector.broadcast %cst_18 : f32 to vector<16x128xf32>
    %20 = arith.maximumf %18, %19 : vector<16x128xf32>
    %c8_19 = arith.constant 8 : index
    %c0_20 = arith.constant 0 : index
    %21 = vector.load %arg10[%c8_19, %c0_20] : memref<24x128xf32, #tpu.memory_space<vmem>>, vector<16x128xf32>
    tpu.vector_store %arg10[%c8_19, %c0_20], %20 {strides = array<i32>} : memref<24x128xf32, #tpu.memory_space<vmem>>, vector<16x128xf32>,
    %c7_21 = arith.constant 7 : index
    %c0_22 = arith.constant 0 : index
    %22 = vector.load %arg10[%c7_21, %c0_22] : memref<24x128xf32, #tpu.memory_space<vmem>>, vector<16x128xf32>
    %c8_23 = arith.constant 8 : index
    %c0_24 = arith.constant 0 : index
    %23 = vector.load %arg10[%c8_23, %c0_24] : memref<24x128xf32, #tpu.memory_space<vmem>>, vector<16x128xf32>
    %24 = tpu.concatenate %22, %23 in 1 : vector<16x128xf32>, vector<16x128xf32> -> vector<16x256xf32>
    %25 = arith.truncf %24 : vector<16x256xf32> to vector<16x256xbf16>
    %c0_25 = arith.constant 0 : index
    %c0_26 = arith.constant 0 : index
    %c0_27 = arith.constant 0 : index
    %26 = vector.load %arg4[%c0_25, %c0_26, %c0_27] : memref<2x256x128xbf16, #tpu.memory_space<vmem>>, vector<1x256x128xbf16>
    %27 = vector.shape_cast %26 : vector<1x256x128xbf16> to vector<256x128xbf16>
    %cst_28 = arith.constant dense<0.000000e+00> : vector<16x128xf32>
    %28 = tpu.matmul %25, %27, %cst_28 {dimension_numbers = #tpu.dot_dimension_numbers<[1], [0], [0], [1], [0, 0, 1, 1], [], []>} : vector<16x256xbf16>, vector<256x128xbf16>, vector<16x128xf32> -> vector<16x128xf32>
    %c0_29 = arith.constant 0 : index
    %c0_30 = arith.constant 0 : index
    %c0_31 = arith.constant 0 : index
    %29 = vector.load %arg5[%c0_29, %c0_30, %c0_31] : memref<2x1x128xf32, #tpu.memory_space<vmem>>, vector<1x1x128xf32>
    %30 = vector.shape_cast %29 : vector<1x1x128xf32> to vector<1x128xf32>
    %31 = vector.broadcast %30 : vector<1x128xf32> to vector<16x128xf32>
    %32 = arith.addf %28, %31 : vector<16x128xf32>
    %cst_32 = arith.constant 0.000000e+00 : f32
    %33 = vector.broadcast %cst_32 : f32 to vector<16x128xf32>
    %34 = arith.maximumf %32, %33 : vector<16x128xf32>
    %c8_33 = arith.constant 8 : index
    %c0_34 = arith.constant 0 : index
    %35 = vector.load %arg9[%c8_33, %c0_34] : memref<24x128xf32, #tpu.memory_space<vmem>>, vector<16x128xf32>
    %36 = arith.truncf %35 : vector<16x128xf32> to vector<16x128xbf16>
    %c0_35 = arith.constant 0 : index
    %c0_36 = arith.constant 0 : index
    %c0_37 = arith.constant 0 : index
    %37 = vector.load %arg6[%c0_35, %c0_36, %c0_37] : memref<1x128x128xbf16, #tpu.memory_space<vmem>>, vector<1x128x128xbf16>
    %38 = vector.shape_cast %37 : vector<1x128x128xbf16> to vector<128x128xbf16>
    %cst_38 = arith.constant dense<0.000000e+00> : vector<16x128xf32>
    %39 = tpu.matmul %36, %38, %cst_38 {dimension_numbers = #tpu.dot_dimension_numbers<[1], [0], [0], [1], [0, 0, 1, 1], [], []>} : vector<16x128xbf16>, vector<128x128xbf16>, vector<16x128xf32> -> vector<16x128xf32>
    %c0_39 = arith.constant 0 : index
    %c0_40 = arith.constant 0 : index
    %c0_41 = arith.constant 0 : index
    %40 = vector.load %arg7[%c0_39, %c0_40, %c0_41] : memref<1x1x128xf32, #tpu.memory_space<vmem>>, vector<1x1x128xf32>
    %41 = vector.shape_cast %40 : vector<1x1x128xf32> to vector<1x128xf32>
    %42 = vector.broadcast %41 : vector<1x128xf32> to vector<16x128xf32>
    %43 = arith.addf %39, %42 : vector<16x128xf32>
    %44 = arith.addf %34, %43 : vector<16x128xf32>
    %cst_42 = arith.constant 0.000000e+00 : f32
    %45 = vector.broadcast %cst_42 : f32 to vector<16x128xf32>
    %46 = arith.maximumf %44, %45 : vector<16x128xf32>
    %c8_43 = arith.constant 8 : index
    %c0_44 = arith.constant 0 : index
    %47 = vector.load %arg9[%c8_43, %c0_44] : memref<24x128xf32, #tpu.memory_space<vmem>>, vector<16x128xf32>
    tpu.vector_store %arg9[%c8_43, %c0_44], %46 {strides = array<i32>} : memref<24x128xf32, #tpu.memory_space<vmem>>, vector<16x128xf32>,
    %c6 = arith.constant 6 : index
    %c0_45 = arith.constant 0 : index
    %48 = vector.load %arg9[%c6, %c0_45] : memref<24x128xf32, #tpu.memory_space<vmem>>, vector<16x128xf32>
    %c8_46 = arith.constant 8 : index
    %c0_47 = arith.constant 0 : index
    %49 = vector.load %arg9[%c8_46, %c0_47] : memref<24x128xf32, #tpu.memory_space<vmem>>, vector<16x128xf32>
    %50 = tpu.concatenate %48, %49 in 1 : vector<16x128xf32>, vector<16x128xf32> -> vector<16x256xf32>
    %51 = arith.truncf %50 : vector<16x256xf32> to vector<16x256xbf16>
    %c1 = arith.constant 1 : index
    %c0_48 = arith.constant 0 : index
    %c0_49 = arith.constant 0 : index
    %52 = vector.load %arg2[%c1, %c0_48, %c0_49] : memref<2x256x128xbf16, #tpu.memory_space<vmem>>, vector<1x256x128xbf16>
    %53 = vector.shape_cast %52 : vector<1x256x128xbf16> to vector<256x128xbf16>
    %cst_50 = arith.constant dense<0.000000e+00> : vector<16x128xf32>
    %54 = tpu.matmul %51, %53, %cst_50 {dimension_numbers = #tpu.dot_dimension_numbers<[1], [0], [0], [1], [0, 0, 1, 1], [], []>} : vector<16x256xbf16>, vector<256x128xbf16>, vector<16x128xf32> -> vector<16x128xf32>
    %c1_51 = arith.constant 1 : index
    %c0_52 = arith.constant 0 : index
    %c0_53 = arith.constant 0 : index
    %55 = vector.load %arg3[%c1_51, %c0_52, %c0_53] : memref<2x1x128xf32, #tpu.memory_space<vmem>>, vector<1x1x128xf32>
    %56 = vector.shape_cast %55 : vector<1x1x128xf32> to vector<1x128xf32>
    %57 = vector.broadcast %56 : vector<1x128xf32> to vector<16x128xf32>
    %58 = arith.addf %54, %57 : vector<16x128xf32>
    %cst_54 = arith.constant 0.000000e+00 : f32
    %59 = vector.broadcast %cst_54 : f32 to vector<16x128xf32>
    %60 = arith.maximumf %58, %59 : vector<16x128xf32>
    %c8_55 = arith.constant 8 : index
    %c0_56 = arith.constant 0 : index
    %61 = vector.load %arg10[%c8_55, %c0_56] : memref<24x128xf32, #tpu.memory_space<vmem>>, vector<16x128xf32>
    tpu.vector_store %arg10[%c8_55, %c0_56], %60 {strides = array<i32>} : memref<24x128xf32, #tpu.memory_space<vmem>>, vector<16x128xf32>,
    %c6_57 = arith.constant 6 : index
    %c0_58 = arith.constant 0 : index
    %62 = vector.load %arg10[%c6_57, %c0_58] : memref<24x128xf32, #tpu.memory_space<vmem>>, vector<16x128xf32>
    %c8_59 = arith.constant 8 : index
    %c0_60 = arith.constant 0 : index
    %63 = vector.load %arg10[%c8_59, %c0_60] : memref<24x128xf32, #tpu.memory_space<vmem>>, vector<16x128xf32>
    %64 = tpu.concatenate %62, %63 in 1 : vector<16x128xf32>, vector<16x128xf32> -> vector<16x256xf32>
    %65 = arith.truncf %64 : vector<16x256xf32> to vector<16x256xbf16>
    %c1_61 = arith.constant 1 : index
    %c0_62 = arith.constant 0 : index
    %c0_63 = arith.constant 0 : index
    %66 = vector.load %arg4[%c1_61, %c0_62, %c0_63] : memref<2x256x128xbf16, #tpu.memory_space<vmem>>, vector<1x256x128xbf16>
    %67 = vector.shape_cast %66 : vector<1x256x128xbf16> to vector<256x128xbf16>
    %cst_64 = arith.constant dense<0.000000e+00> : vector<16x128xf32>
    %68 = tpu.matmul %65, %67, %cst_64 {dimension_numbers = #tpu.dot_dimension_numbers<[1], [0], [0], [1], [0, 0, 1, 1], [], []>} : vector<16x256xbf16>, vector<256x128xbf16>, vector<16x128xf32> -> vector<16x128xf32>
    %c1_65 = arith.constant 1 : index
    %c0_66 = arith.constant 0 : index
    %c0_67 = arith.constant 0 : index
    %69 = vector.load %arg5[%c1_65, %c0_66, %c0_67] : memref<2x1x128xf32, #tpu.memory_space<vmem>>, vector<1x1x128xf32>
    %70 = vector.shape_cast %69 : vector<1x1x128xf32> to vector<1x128xf32>
    %71 = vector.broadcast %70 : vector<1x128xf32> to vector<16x128xf32>
    %72 = arith.addf %68, %71 : vector<16x128xf32>
    %cst_68 = arith.constant 0.000000e+00 : f32
    %73 = vector.broadcast %cst_68 : f32 to vector<16x128xf32>
    %74 = arith.maximumf %72, %73 : vector<16x128xf32>
    %c8_69 = arith.constant 8 : index
    %c0_70 = arith.constant 0 : index
    %75 = vector.load %arg9[%c8_69, %c0_70] : memref<24x128xf32, #tpu.memory_space<vmem>>, vector<16x128xf32>
    %76 = arith.addf %74, %75 : vector<16x128xf32>
    %cst_71 = arith.constant 0.000000e+00 : f32
    %77 = vector.broadcast %cst_71 : f32 to vector<16x128xf32>
    %78 = arith.maximumf %76, %77 : vector<16x128xf32>
    %79 = arith.truncf %78 : vector<16x128xf32> to vector<16x128xbf16>
    %c0_72 = arith.constant 0 : index
    %c0_73 = arith.constant 0 : index
    %c0_74 = arith.constant 0 : index
    %80 = vector.load %arg8[%c0_72, %c0_73, %c0_74] : memref<1x16x128xbf16, #tpu.memory_space<vmem>>, vector<1x16x128xbf16>
    %81 = vector.shape_cast %80 : vector<1x16x128xbf16> to vector<16x128xbf16>
    %82 = vector.shape_cast %79 : vector<16x128xbf16> to vector<1x16x128xbf16>
    tpu.vector_store %arg8[%c0_72, %c0_73, %c0_74], %82 {strides = array<i32>} : memref<1x16x128xbf16, #tpu.memory_space<vmem>>, vector<1x16x128xbf16>,
    return
  }
  func.func @transform_0(%arg0: i32) -> (i32, i32, i32) {
    %c0_i32 = arith.constant 0 : i32
    %c0_i32_0 = arith.constant 0 : i32
    %c0_i32_1 = arith.constant 0 : i32
    return %arg0, %c0_i32, %c0_i32_0 : i32, i32, i32
  }
  func.func @transform_1(%arg0: i32) -> (i32, i32, i32) {
    %c0_i32 = arith.constant 0 : i32
    %c0_i32_0 = arith.constant 0 : i32
    %c0_i32_1 = arith.constant 0 : i32
    %c0_i32_2 = arith.constant 0 : i32
    return %c0_i32, %c0_i32_0, %c0_i32_1 : i32, i32, i32
  }
  func.func @transform_2(%arg0: i32) -> (i32, i32, i32) {
    %c0_i32 = arith.constant 0 : i32
    %c0_i32_0 = arith.constant 0 : i32
    %c0_i32_1 = arith.constant 0 : i32
    %c0_i32_2 = arith.constant 0 : i32
    return %c0_i32, %c0_i32_0, %c0_i32_1 : i32, i32, i32
  }
  func.func @transform_3(%arg0: i32) -> (i32, i32, i32) {
    %c0_i32 = arith.constant 0 : i32
    %c0_i32_0 = arith.constant 0 : i32
    %c0_i32_1 = arith.constant 0 : i32
    %c0_i32_2 = arith.constant 0 : i32
    return %c0_i32, %c0_i32_0, %c0_i32_1 : i32, i32, i32
  }
  func.func @transform_4(%arg0: i32) -> (i32, i32, i32) {
    %c0_i32 = arith.constant 0 : i32
    %c0_i32_0 = arith.constant 0 : i32
    %c0_i32_1 = arith.constant 0 : i32
    %c0_i32_2 = arith.constant 0 : i32
    return %c0_i32, %c0_i32_0, %c0_i32_1 : i32, i32, i32
  }
  func.func @transform_5(%arg0: i32) -> (i32, i32, i32) {
    %c0_i32 = arith.constant 0 : i32
    %c0_i32_0 = arith.constant 0 : i32
    %c0_i32_1 = arith.constant 0 : i32
    %c0_i32_2 = arith.constant 0 : i32
    return %c0_i32, %c0_i32_0, %c0_i32_1 : i32, i32, i32
  }
  func.func @transform_6(%arg0: i32) -> (i32, i32, i32) {
    %c0_i32 = arith.constant 0 : i32
    %c0_i32_0 = arith.constant 0 : i32
    %c0_i32_1 = arith.constant 0 : i32
    %c0_i32_2 = arith.constant 0 : i32
    return %c0_i32, %c0_i32_0, %c0_i32_1 : i32, i32, i32
  }
  func.func @transform_7(%arg0: i32) -> (i32, i32, i32) {
    %c0_i32 = arith.constant 0 : i32
    %c0_i32_0 = arith.constant 0 : i32
    %c0_i32_1 = arith.constant 0 : i32
    return %arg0, %c0_i32, %c0_i32_0 : i32, i32, i32
  }
}

</mosaic_0001>

<llo_original>
// kernel: tpu_custom_call.1
$region0: #{tpu_custom_call.1}
  #allocation0 [shape = 'u32[]', space=smem, size = 0x4, offset = 0x4, fixed_abs, tag = 'smem constant byte address 0x4 - core index']
  #allocation1 [shape = 'u32[144,128]{1,0:T(1,128)}', space=vmem, size = 0x12000, scoped, tag = 'internal scratch']
  #allocation2 [shape = 'f32[24,128]{1,0:T(8,128)}', space=vmem, size = 0x3000, scoped, tag = 'scratch operand']
  #allocation3 [shape = 'f32[24,128]{1,0:T(8,128)}', space=vmem, size = 0x3000, scoped, tag = 'scratch operand']
  %s0 = inlined_call_operand.hbm [shape: bf16[2,16,128], index: 0, kind: input, shape index: {}]
  %s1 = inlined_call_operand.hbm [shape: bf16[2,256,128], index: 1, kind: input, shape index: {}]
  %s2 = inlined_call_operand.vmem [shape: f32[2,1,128], index: 2, kind: input, shape index: {}]
  %s3 = inlined_call_operand.hbm [shape: bf16[2,256,128], index: 3, kind: input, shape index: {}]
  %s4 = inlined_call_operand.vmem [shape: f32[2,1,128], index: 4, kind: input, shape index: {}]
  %s5 = inlined_call_operand.hbm [shape: bf16[1,128,128], index: 5, kind: input, shape index: {}]
  %s6 = inlined_call_operand.vmem [shape: f32[1,1,128], index: 6, kind: input, shape index: {}]
  %s7 = inlined_call_operand.hbm [shape: bf16[2,16,128], index: 7, kind: output, shape index: {}]
  %s8 = sld [smem:[#allocation0]]
  $region77: #{tpu_custom_call.1} parent=0
    _
  %s10 = ssub.s32 1, %s8
  %s11 = scalar_select 0, %s10, %s8
  $region1: #{tpu_custom_call.1} parent=0
    #allocation4 [shape = 'u8[8192]{0}', space=vmem, size = 0x2000, scoped, tag = 'input window, operand 0']
    #allocation5 [shape = 's32[2]{0}', space=sflag, size = 0x8, scoped, tag = 'scoped memory for tpu_custom_call.1']
    #allocation6 [shape = 's32[2]{0}', space=sflag, size = 0x8, scoped, tag = 'scoped memory for tpu_custom_call.1']
    #allocation7 [shape = 'u8[131072]{0}', space=vmem, size = 0x20000, scoped, tag = 'input window, operand 1, single buffered']
    #allocation8 [shape = 's32[1]{0}', space=sflag, size = 0x4, scoped, tag = 'scoped memory for tpu_custom_call.1']
    #allocation9 [shape = 'u8[131072]{0}', space=vmem, size = 0x20000, scoped, tag = 'input window, operand 3, single buffered']
    #allocation10 [shape = 'u8[32768]{0}', space=vmem, size = 0x8000, scoped, tag = 'input window, operand 5, single buffered']
    #allocation11 [shape = 's32[1]{0}', space=sflag, size = 0x4, scoped, tag = 'scoped memory for tpu_custom_call.1']
    #allocation12 [shape = 'u8[8192]{0}', space=vmem, size = 0x2000, scoped, tag = 'output window, operand 0']
    %12 = vsyncpa [#allocation5], 0
    %s13 = scalar_lea.sflag [#allocation5], 1
    %14 = vsyncpa %s13, 0
    %15 = vsyncpa [#allocation8], 0
    %16 = vsyncpa [#allocation11], 0
    %17 = vsyncpa [#allocation6], 0
    %s18 = scalar_lea.sflag [#allocation6], 1
    %19 = vsyncpa %s18, 0
    loop: start=0, step=1, limit=4
    $region2: #{tpu_custom_call.1} parent=1 // loop_pre_header
      _
    $region3: #{tpu_custom_call.1} parent=1 // loop_header
      %s21 = sphi 0, %s25
      %p22 = scmp.ge.s32.totalorder %s21, 4
      %s31 = sphi 0, %s33
      %s34 = sphi 0, %s31
      %s35 = sphi 0, %s34
      %s51 = sphi 0, %s35
      %s55 = sphi 0, %s55
      %s57 = sphi 0, %s55
      %s58 = sphi 0, %s57
      %s72 = sphi 0, %s58
      %s76 = sphi 0, %s76
      %s78 = sphi 0, %s76
      %s79 = sphi 0, %s78
      %s93 = sphi 0, %s79
      %s97 = sphi 0, %s97
      %s99 = sphi 0, %s97
      %s100 = sphi 0, %s99
      %s114 = sphi 0, %s100
      %s118 = sphi 0, %s118
      %s120 = sphi 0, %s118
      %s121 = sphi 0, %s120
      %s135 = sphi 0, %s121
      %s139 = sphi 0, %s139
      %s141 = sphi 0, %s139
      %s142 = sphi 0, %s141
      %s156 = sphi 0, %s142
      %s160 = sphi 0, %s160
      %s162 = sphi 0, %s160
      %s163 = sphi 0, %s162
      %s177 = sphi 0, %s163
      %s183 = sphi 0, %s185
      %s186 = sphi 0, %s183
      %s187 = sphi 0, %s186
      %s203 = sphi 0, %s187
    $region4: #{tpu_custom_call.1} parent=1 // loop_header_branch
      %24 = sbr.rel (%p22) target = $region8
    $region5: #{tpu_custom_call.1} parent=1 // loop_body
      %s26 = ssub.s32 %s21, 1
      %s27 = ssub.s32 %s21, 2
      %s28 = sadd.s32 %s21, 1
      %s29 = ssub.s32 %s21, %s28
      %p30 = scmp.eq.s32.totalorder %s29, 0
      %s32 = sadd.s32 %s31, 1
      %s33 = scalar_select %p30, %s31, %s32
      %p36 = pneg %p30
      %p37 = scmp.eq.s32.totalorder %s21, 1
      %p38 = por %p36, %p37
      %p39 = scmp.ne.s32.totalorder %s31, %s34
      %p40 = scmp.eq.s32.totalorder %s21, 0
      %p41 = por %p39, %p40
      %p42 = scmp.ne.s32.totalorder %s31, %s34
      %p43 = scmp.eq.s32.totalorder %s26, 1
      %p44 = por %p42, %p43
      %p45 = scmp.ne.s32.totalorder %s34, %s35
      %p46 = scmp.eq.s32.totalorder %s26, 0
      %p47 = por %p45, %p46
      %p48 = scmp.ne.s32.totalorder %s34, %s35
      %p49 = scmp.eq.s32.totalorder %s27, 1
      %p50 = por %p48, %p49
      %p52 = scmp.ne.s32.totalorder %s35, %s51
      %p53 = scmp.eq.s32.totalorder %s27, 0
      %p54 = por %p52, %p53
      %s56 = sadd.s32 %s55, 1
      %p59 = scmp.eq.s32.totalorder %s21, 1
      %p60 = scmp.ne.s32.totalorder %s55, %s57
      %p61 = scmp.eq.s32.totalorder %s21, 0
      %p62 = por %p60, %p61
      %p63 = scmp.ne.s32.totalorder %s55, %s57
      %p64 = scmp.eq.s32.totalorder %s26, 1
      %p65 = por %p63, %p64
      %p66 = scmp.ne.s32.totalorder %s57, %s58
      %p67 = scmp.eq.s32.totalorder %s26, 0
      %p68 = por %p66, %p67
      %p69 = scmp.ne.s32.totalorder %s57, %s58
      %p70 = scmp.eq.s32.totalorder %s27, 1
      %p71 = por %p69, %p70
      %p73 = scmp.ne.s32.totalorder %s58, %s72
      %p74 = scmp.eq.s32.totalorder %s27, 0
      %p75 = por %p73, %p74
      %s77 = sadd.s32 %s76, 1
      %p80 = scmp.eq.s32.totalorder %s21, 1
      %p81 = scmp.ne.s32.totalorder %s76, %s78
      %p82 = scmp.eq.s32.totalorder %s21, 0
      %p83 = por %p81, %p82
      %p84 = scmp.ne.s32.totalorder %s76, %s78
      %p85 = scmp.eq.s32.totalorder %s26, 1
      %p86 = por %p84, %p85
      %p87 = scmp.ne.s32.totalorder %s78, %s79
      %p88 = scmp.eq.s32.totalorder %s26, 0
      %p89 = por %p87, %p88
      %p90 = scmp.ne.s32.totalorder %s78, %s79
      %p91 = scmp.eq.s32.totalorder %s27, 1
      %p92 = por %p90, %p91
      %p94 = scmp.ne.s32.totalorder %s79, %s93
      %p95 = scmp.eq.s32.totalorder %s27, 0
      %p96 = por %p94, %p95
      %s98 = sadd.s32 %s97, 1
      %p101 = scmp.eq.s32.totalorder %s21, 1
      %p102 = scmp.ne.s32.totalorder %s97, %s99
      %p103 = scmp.eq.s32.totalorder %s21, 0
      %p104 = por %p102, %p103
      %p105 = scmp.ne.s32.totalorder %s97, %s99
      %p106 = scmp.eq.s32.totalorder %s26, 1
      %p107 = por %p105, %p106
      %p108 = scmp.ne.s32.totalorder %s99, %s100
      %p109 = scmp.eq.s32.totalorder %s26, 0
      %p110 = por %p108, %p109
      %p111 = scmp.ne.s32.totalorder %s99, %s100
      %p112 = scmp.eq.s32.totalorder %s27, 1
      %p113 = por %p111, %p112
      %p115 = scmp.ne.s32.totalorder %s100, %s114
      %p116 = scmp.eq.s32.totalorder %s27, 0
      %p117 = por %p115, %p116
      %s119 = sadd.s32 %s118, 1
      %p122 = scmp.eq.s32.totalorder %s21, 1
      %p123 = scmp.ne.s32.totalorder %s118, %s120
      %p124 = scmp.eq.s32.totalorder %s21, 0
      %p125 = por %p123, %p124
      %p126 = scmp.ne.s32.totalorder %s118, %s120
      %p127 = scmp.eq.s32.totalorder %s26, 1
      %p128 = por %p126, %p127
      %p129 = scmp.ne.s32.totalorder %s120, %s121
      %p130 = scmp.eq.s32.totalorder %s26, 0
      %p131 = por %p129, %p130
      %p132 = scmp.ne.s32.totalorder %s120, %s121
      %p133 = scmp.eq.s32.totalorder %s27, 1
      %p134 = por %p132, %p133
      %p136 = scmp.ne.s32.totalorder %s121, %s135
      %p137 = scmp.eq.s32.totalorder %s27, 0
      %p138 = por %p136, %p137
      %s140 = sadd.s32 %s139, 1
      %p143 = scmp.eq.s32.totalorder %s21, 1
      %p144 = scmp.ne.s32.totalorder %s139, %s141
      %p145 = scmp.eq.s32.totalorder %s21, 0
      %p146 = por %p144, %p145
      %p147 = scmp.ne.s32.totalorder %s139, %s141
      %p148 = scmp.eq.s32.totalorder %s26, 1
      %p149 = por %p147, %p148
      %p150 = scmp.ne.s32.totalorder %s141, %s142
      %p151 = scmp.eq.s32.totalorder %s26, 0
      %p152 = por %p150, %p151
      %p153 = scmp.ne.s32.totalorder %s141, %s142
      %p154 = scmp.eq.s32.totalorder %s27, 1
      %p155 = por %p153, %p154
      %p157 = scmp.ne.s32.totalorder %s142, %s156
      %p158 = scmp.eq.s32.totalorder %s27, 0
      %p159 = por %p157, %p158
      %s161 = sadd.s32 %s160, 1
      %p164 = scmp.eq.s32.totalorder %s21, 1
      %p165 = scmp.ne.s32.totalorder %s160, %s162
      %p166 = scmp.eq.s32.totalorder %s21, 0
      %p167 = por %p165, %p166
      %p168 = scmp.ne.s32.totalorder %s160, %s162
      %p169 = scmp.eq.s32.totalorder %s26, 1
      %p170 = por %p168, %p169
      %p171 = scmp.ne.s32.totalorder %s162, %s163
      %p172 = scmp.eq.s32.totalorder %s26, 0
      %p173 = por %p171, %p172
      %p174 = scmp.ne.s32.totalorder %s162, %s163
      %p175 = scmp.eq.s32.totalorder %s27, 1
      %p176 = por %p174, %p175
      %p178 = scmp.ne.s32.totalorder %s163, %s177
      %p179 = scmp.eq.s32.totalorder %s27, 0
      %p180 = por %p178, %p179
      %s181 = ssub.s32 %s21, %s28
      %p182 = scmp.eq.s32.totalorder %s181, 0
      %s184 = sadd.s32 %s183, 1
      %s185 = scalar_select %p182, %s183, %s184
      %p188 = pneg %p182
      %p189 = scmp.eq.s32.totalorder %s21, 1
      %p190 = por %p188, %p189
      %p191 = scmp.ne.s32.totalorder %s183, %s186
      %p192 = scmp.eq.s32.totalorder %s21, 0
      %p193 = por %p191, %p192
      %p194 = scmp.ne.s32.totalorder %s183, %s186
      %p195 = scmp.eq.s32.totalorder %s26, 1
      %p196 = por %p194, %p195
      %p197 = scmp.ne.s32.totalorder %s186, %s187
      %p198 = scmp.eq.s32.totalorder %s26, 0
      %p199 = por %p197, %p198
      %p200 = scmp.ne.s32.totalorder %s186, %s187
      %p201 = scmp.eq.s32.totalorder %s27, 1
      %p202 = por %p200, %p201
      %p204 = scmp.ne.s32.totalorder %s187, %s203
      %p205 = scmp.eq.s32.totalorder %s27, 0
      %p206 = por %p204, %p205
      %p207 = scmp.le.s32.totalorder 1, %s21
      %p208 = scmp.lt.s32.totalorder %s21, 3
      %p209 = pnand %p207, %p208
      %p210 = pneg %p209
      // Predicated region
      $region9: #{tpu_custom_call.1} parent=5 // pred_check
        _
      $region10: #{tpu_custom_call.1} parent=5 // pred_check_branch
        %212 = sbr.rel (%p209) target = $region12
      $region11: #{tpu_custom_call.1} parent=5 // pred_region
        %s213 = ssub.s32 %s21, 1
        // Predicated region
        $region13: #{tpu_custom_call.1} parent=11 // pred_check
          %p214 = pneg %p68
        $region14: #{tpu_custom_call.1} parent=11 // pred_check_branch
          %216 = sbr.rel (%p214) target = $region16
        $region15: #{tpu_custom_call.1} parent=11 // pred_region
          %s218 = ssub.s32 4096, 4096
          %219 = vsyncadd [#allocation8], %s218
          %s220 = sshll.u32 [#allocation7], 4
          %s221 = int_to_ptr.vmem [resolvable:$true] %s220
          %226 = dma.hbm_to_vmem [thread:$0]  %s1, 4096, %s221, [#allocation8], 64, 64, 4
        $region16: #{tpu_custom_call.1} parent=11 // pred_fallthru
          _
        // Predicated region
        $region17: #{tpu_custom_call.1} parent=11 // pred_check
          %p227 = pneg %p89
        $region18: #{tpu_custom_call.1} parent=11 // pred_check_branch
          %229 = sbr.rel (%p227) target = $region20
        $region19: #{tpu_custom_call.1} parent=11 // pred_region
          _
        $region20: #{tpu_custom_call.1} parent=11 // pred_fallthru
          _
        // Predicated region
        $region21: #{tpu_custom_call.1} parent=11 // pred_check
          %p230 = pneg %p110
        $region22: #{tpu_custom_call.1} parent=11 // pred_check_branch
          %232 = sbr.rel (%p230) target = $region24
        $region23: #{tpu_custom_call.1} parent=11 // pred_region
          %s234 = ssub.s32 4096, 4096
          %235 = vsyncadd [#allocation8], %s234
          %s236 = sshll.u32 [#allocation9], 4
          %s237 = int_to_ptr.vmem [resolvable:$true] %s236
          %242 = dma.hbm_to_vmem [thread:$0]  %s3, 4096, %s237, [#allocation8], 64, 64, 4
        $region24: #{tpu_custom_call.1} parent=11 // pred_fallthru
          _
        // Predicated region
        $region25: #{tpu_custom_call.1} parent=11 // pred_check
          %p243 = pneg %p131
        $region26: #{tpu_custom_call.1} parent=11 // pred_check_branch
          %245 = sbr.rel (%p243) target = $region28
        $region27: #{tpu_custom_call.1} parent=11 // pred_region
          _
        $region28: #{tpu_custom_call.1} parent=11 // pred_fallthru
          _
        // Predicated region
        $region29: #{tpu_custom_call.1} parent=11 // pred_check
          %p246 = pneg %p152
        $region30: #{tpu_custom_call.1} parent=11 // pred_check_branch
          %248 = sbr.rel (%p246) target = $region32
        $region31: #{tpu_custom_call.1} parent=11 // pred_region
          %s250 = ssub.s32 1024, 1024
          %251 = vsyncadd [#allocation11], %s250
          %s252 = sshll.u32 [#allocation10], 4
          %s253 = int_to_ptr.vmem [resolvable:$true] %s252
          %258 = dma.hbm_to_vmem [thread:$0]  %s5, 1024, %s253, [#allocation11], 64, 64, 4
        $region32: #{tpu_custom_call.1} parent=11 // pred_fallthru
          _
        // Predicated region
        $region33: #{tpu_custom_call.1} parent=11 // pred_check
          %p259 = pneg %p173
        $region34: #{tpu_custom_call.1} parent=11 // pred_check_branch
          %261 = sbr.rel (%p259) target = $region36
        $region35: #{tpu_custom_call.1} parent=11 // pred_region
          _
        $region36: #{tpu_custom_call.1} parent=11 // pred_fallthru
          _
      $region12: #{tpu_custom_call.1} parent=5 // pred_fallthru
        _
      %p262 = scmp.lt.s32.totalorder %s21, 2
      // Predicated region
      $region37: #{tpu_custom_call.1} parent=5 // pred_check
        %p263 = pneg %p262
      $region38: #{tpu_custom_call.1} parent=5 // pred_check_branch
        %265 = sbr.rel (%p263) target = $region40
      $region39: #{tpu_custom_call.1} parent=5 // pred_region
        // Predicated region
        $region41: #{tpu_custom_call.1} parent=39 // pred_check
          %p266 = pneg %p41
        $region42: #{tpu_custom_call.1} parent=39 // pred_check_branch
          %268 = sbr.rel (%p266) target = $region44
        $region43: #{tpu_custom_call.1} parent=39 // pred_region
          %s269 = sand.u32 %s31, 1
          %s270 = scalar_lea.sflag [#allocation5], %s269
          %s271 = sand.u32 %s31, 1
          %s272 = smul.addr %s271, 8
          %s273 = scalar_lea.vmem [#allocation4], %s272
          %s275 = ssub.s32 128, 128
          %276 = vsyncadd %s270, %s275
          %s277 = smul.addr %s21, 2
          %s278 = smul.addr %s277, 64
          %s279 = scalar_lea.hbm %s0, %s278
          %s280 = sshll.u32 %s273, 4
          %s281 = int_to_ptr.vmem [resolvable:$true] %s280
          %286 = dma.hbm_to_vmem [thread:$0]  %s279, 128, %s281, %s270, 64, 64, 4
        $region44: #{tpu_custom_call.1} parent=39 // pred_fallthru
          _
      $region40: #{tpu_custom_call.1} parent=5 // pred_fallthru
        _
      %p287 = scmp.le.s32.totalorder 1, %s21
      %p288 = scmp.lt.s32.totalorder %s21, 3
      %p289 = pnand %p287, %p288
      %p290 = pneg %p289
      // Predicated region
      $region45: #{tpu_custom_call.1} parent=5 // pred_check
        _
      $region46: #{tpu_custom_call.1} parent=5 // pred_check_branch
        %292 = sbr.rel (%p289) target = $region48
      $region47: #{tpu_custom_call.1} parent=5 // pred_region
        %s293 = ssub.s32 %s21, 1
        %s294 = sand.u32 %s34, 1
        %s295 = scalar_lea.sflag [#allocation5], %s294
        %s296 = sand.u32 %s34, 1
        %s297 = smul.addr %s296, 8
        %s298 = scalar_lea.vmem [#allocation4], %s297
        // Predicated region
        $region49: #{tpu_custom_call.1} parent=47 // pred_check
          %p299 = pneg %p47
        $region50: #{tpu_custom_call.1} parent=47 // pred_check_branch
          %301 = sbr.rel (%p299) target = $region52
        $region51: #{tpu_custom_call.1} parent=47 // pred_region
          %302 = dma.done %s295, 128
        $region52: #{tpu_custom_call.1} parent=47 // pred_fallthru
          _
        // Predicated region
        $region53: #{tpu_custom_call.1} parent=47 // pred_check
          %p303 = pneg %p68
        $region54: #{tpu_custom_call.1} parent=47 // pred_check_branch
          %305 = sbr.rel (%p303) target = $region56
        $region55: #{tpu_custom_call.1} parent=47 // pred_region
          %306 = dma.done [#allocation8], 4096
        $region56: #{tpu_custom_call.1} parent=47 // pred_fallthru
          _
        // Predicated region
        $region57: #{tpu_custom_call.1} parent=47 // pred_check
          %p307 = pneg %p110
        $region58: #{tpu_custom_call.1} parent=47 // pred_check_branch
          %309 = sbr.rel (%p307) target = $region60
        $region59: #{tpu_custom_call.1} parent=47 // pred_region
          %310 = dma.done [#allocation8], 4096
        $region60: #{tpu_custom_call.1} parent=47 // pred_fallthru
          _
        // Predicated region
        $region61: #{tpu_custom_call.1} parent=47 // pred_check
          %p311 = pneg %p152
        $region62: #{tpu_custom_call.1} parent=47 // pred_check_branch
          %313 = sbr.rel (%p311) target = $region64
        $region63: #{tpu_custom_call.1} parent=47 // pred_region
          %314 = dma.done [#allocation11], 1024
        $region64: #{tpu_custom_call.1} parent=47 // pred_fallthru
          _
        %s315 = sand.u32 %s34, 1
        %s316 = scalar_lea.sflag [#allocation5], %s315
        %s317 = sand.u32 %s34, 1
        %s318 = smul.addr %s317, 8
        %s319 = scalar_lea.vmem [#allocation4], %s318
        %p320 = pneg %p47
        %p321 = pneg %p44
        %p322 = pneg %p68
        %p323 = pneg %p65
        %p324 = pneg %p89
        %p325 = pneg %p86
        %p326 = pneg %p110
        %p327 = pneg %p107
        %p328 = pneg %p131
        %p329 = pneg %p128
        %p330 = pneg %p152
        %p331 = pneg %p149
        %p332 = pneg %p173
        %p333 = pneg %p170
        %p334 = pneg %p199
        %p335 = pneg %p196
        %s336 = sand.u32 %s186, 1
        %s337 = scalar_lea.sflag [#allocation6], %s336
        %s338 = sand.u32 %s186, 1
        %s339 = smul.addr %s338, 8
        %s340 = scalar_lea.vmem [#allocation12], %s339
        %342 = vst [vmem:[#allocation2] sm:$0xff] 0.0
        %343 = vst [vmem:[#allocation3] sm:$0xff] 0.0
        %v344 = vld [vmem:[%s298] sm:$0xf]
        %v345 = vld [vmem:[%s298 + $0x4] sm:$0xf]
        %v346 = vunpack.c.l.bf16 %v344
        %v347 = vunpack.c.l.bf16 %v345
        %348 = vst [vmem:[#allocation2 + $0x8] sm:$0xff] %v346
        %349 = vst [vmem:[#allocation2 + $0x10] sm:$0xff] %v347
        %v350 = vld [vmem:[#allocation2 + $0x7] sm:$0xff]
        %v351 = vld [vmem:[#allocation2 + $0xf] sm:$0xff]
        %v352 = vld [vmem:[#allocation2 + $0x8] sm:$0xff]
        %v353 = vld [vmem:[#allocation2 + $0x10] sm:$0xff]
        %v354 = vpack.c.bf16 %v351, %v350
        %v355 = vpack.c.bf16 %v353, %v352
        %v356 = vld [vmem:[#allocation7] sm:$0xf]
        %v357 = vld [vmem:[#allocation7 + $0x4] sm:$0xf]
        %v358 = vld [vmem:[#allocation7 + $0x8] sm:$0xf]
        %v359 = vld [vmem:[#allocation7 + $0xc] sm:$0xf]
        %v360 = vld [vmem:[#allocation7 + $0x10] sm:$0xf]
        %v361 = vld [vmem:[#allocation7 + $0x14] sm:$0xf]
        %v362 = vld [vmem:[#allocation7 + $0x18] sm:$0xf]
        %v363 = vld [vmem:[#allocation7 + $0x1c] sm:$0xf]
        %v364 = vld [vmem:[#allocation7 + $0x20] sm:$0xf]
        %v365 = vld [vmem:[#allocation7 + $0x24] sm:$0xf]
        %v366 = vld [vmem:[#allocation7 + $0x28] sm:$0xf]
        %v367 = vld [vmem:[#allocation7 + $0x2c] sm:$0xf]
        %v368 = vld [vmem:[#allocation7 + $0x30] sm:$0xf]
        %v369 = vld [vmem:[#allocation7 + $0x34] sm:$0xf]
        %v370 = vld [vmem:[#allocation7 + $0x38] sm:$0xf]
        %v371 = vld [vmem:[#allocation7 + $0x3c] sm:$0xf]
        %v372 = vld [vmem:[#allocation7 + $0x40] sm:$0xf]
        %v373 = vld [vmem:[#allocation7 + $0x44] sm:$0xf]
        %v374 = vld [vmem:[#allocation7 + $0x48] sm:$0xf]
        %v375 = vld [vmem:[#allocation7 + $0x4c] sm:$0xf]
        %v376 = vld [vmem:[#allocation7 + $0x50] sm:$0xf]
        %v377 = vld [vmem:[#allocation7 + $0x54] sm:$0xf]
        %v378 = vld [vmem:[#allocation7 + $0x58] sm:$0xf]
        %v379 = vld [vmem:[#allocation7 + $0x5c] sm:$0xf]
        %v380 = vld [vmem:[#allocation7 + $0x60] sm:$0xf]
        %v381 = vld [vmem:[#allocation7 + $0x64] sm:$0xf]
        %v382 = vld [vmem:[#allocation7 + $0x68] sm:$0xf]
        %v383 = vld [vmem:[#allocation7 + $0x6c] sm:$0xf]
        %v384 = vld [vmem:[#allocation7 + $0x70] sm:$0xf]
        %v385 = vld [vmem:[#allocation7 + $0x74] sm:$0xf]
        %v386 = vld [vmem:[#allocation7 + $0x78] sm:$0xf]
        %v387 = vld [vmem:[#allocation7 + $0x7c] sm:$0xf]
        %v388 = vld [vmem:[%s2] sm:$0x1]
        %v390 = vlaneseq
        %v391 = vshrl.u32 %v390, 7
        %v392 = vsub.s32 0, %v391
        %v393 = vrot.slane %v388, %v392
        %v427 = vunpack.c.l.b16 %v356
        %v428 = vunpack.c.l.b16 %v357
        %v429 = vunpack.c.l.b16 %v358
        %v430 = vunpack.c.l.b16 %v359
        %v431 = vunpack.c.l.b16 %v360
        %v432 = vunpack.c.l.b16 %v361
        %v433 = vunpack.c.l.b16 %v362
        %v434 = vunpack.c.l.b16 %v363
        %v435 = vunpack.c.l.b16 %v364
        %v436 = vunpack.c.l.b16 %v365
        %v437 = vunpack.c.l.b16 %v366
        %v438 = vunpack.c.l.b16 %v367
        %v439 = vunpack.c.l.b16 %v368
        %v440 = vunpack.c.l.b16 %v369
        %v441 = vunpack.c.l.b16 %v370
        %v442 = vunpack.c.l.b16 %v371
        %v443 = vunpack.c.l.b16 %v372
        %v444 = vunpack.c.l.b16 %v373
        %v445 = vunpack.c.l.b16 %v374
        %v446 = vunpack.c.l.b16 %v375
        %v447 = vunpack.c.l.b16 %v376
        %v448 = vunpack.c.l.b16 %v377
        %v449 = vunpack.c.l.b16 %v378
        %v450 = vunpack.c.l.b16 %v379
        %v451 = vunpack.c.l.b16 %v380
        %v452 = vunpack.c.l.b16 %v381
        %v453 = vunpack.c.l.b16 %v382
        %v454 = vunpack.c.l.b16 %v383
        %v455 = vunpack.c.l.b16 %v384
        %v456 = vunpack.c.l.b16 %v385
        %v457 = vunpack.c.l.b16 %v386
        %v458 = vunpack.c.l.b16 %v387
        %v459 = vpack.c.b16 %v428, %v427
        %v460 = vpack.c.b16 %v430, %v429
        %v461 = vpack.c.b16 %v432, %v431
        %v462 = vpack.c.b16 %v434, %v433
        %v463 = vpack.c.b16 %v436, %v435
        %v464 = vpack.c.b16 %v438, %v437
        %v465 = vpack.c.b16 %v440, %v439
        %v466 = vpack.c.b16 %v442, %v441
        %v467 = vpack.c.b16 %v444, %v443
        %v468 = vpack.c.b16 %v446, %v445
        %v469 = vpack.c.b16 %v448, %v447
        %v470 = vpack.c.b16 %v450, %v449
        %v471 = vpack.c.b16 %v452, %v451
        %v472 = vpack.c.b16 %v454, %v453
        %v473 = vpack.c.b16 %v456, %v455
        %v474 = vpack.c.b16 %v458, %v457
        %491 = vmatprep.subr.bf16.mxu0 0
        %492 = vmatpush1.bf16.msra.mxu0 %v459
        %493 = vmatprep.subr.bf16.mxu0 0
        %494 = vmatpush1.bf16.msra.mxu0 %v460
        %495 = vmatprep.subr.bf16.mxu0 0
        %496 = vmatpush1.bf16.msra.mxu0 %v461
        %497 = vmatprep.subr.bf16.mxu0 0
        %498 = vmatpush1.bf16.msra.mxu0 %v462
        %499 = vmatprep.subr.bf16.mxu0 0
        %500 = vmatpush1.bf16.msra.mxu0 %v463
        %501 = vmatprep.subr.bf16.mxu0 0
        %502 = vmatpush1.bf16.msra.mxu0 %v464
        %503 = vmatprep.subr.bf16.mxu0 0
        %504 = vmatpush1.bf16.msra.mxu0 %v465
        %505 = vmatprep.subr.bf16.mxu0 0
        %506 = vmatpush1.bf16.msra.mxu0 %v466
        %507 = vmatprep.subr.bf16.mxu0 0
        %508 = vmatpush1.bf16.msra.mxu0 %v467
        %509 = vmatprep.subr.bf16.mxu0 0
        %510 = vmatpush1.bf16.msra.mxu0 %v468
        %511 = vmatprep.subr.bf16.mxu0 0
        %512 = vmatpush1.bf16.msra.mxu0 %v469
        %513 = vmatprep.subr.bf16.mxu0 0
        %514 = vmatpush1.bf16.msra.mxu0 %v470
        %515 = vmatprep.subr.bf16.mxu0 0
        %516 = vmatpush1.bf16.msra.mxu0 %v471
        %517 = vmatprep.subr.bf16.mxu0 0
        %518 = vmatpush1.bf16.msra.mxu0 %v472
        %519 = vmatprep.subr.bf16.mxu0 0
        %520 = vmatpush1.bf16.msra.mxu0 %v473
        %521 = vmatprep.subr.bf16.mxu0 0
        %522 = vmatpush1.bf16.msra.mxu0 %v474
        %523 = vmatprep.mubr.bf16.mxu0 %v355
        %524 = vmatmul.mubr.bf16.gmra.mrb[0].mxu0 %v354
        %v525 = vpop.f32.mrb[0].mxu0
        %v526 = vadd.f32 %v393, %v525
        %v527 = vpop.f32.mrb[0].mxu0
        %v528 = vpop.f32.mrb[0].mxu0
        %v529 = vadd.f32 %v393, %v528
        %v530 = vpop.f32.mrb[0].mxu0
        %531 = vdwg.mxu0
        %v532 = vmax.f32 %v526, 0.0
        %v533 = vmax.f32 %v529, 0.0
        %534 = vst [vmem:[#allocation3 + $0x8] sm:$0xff] %v532
        %535 = vst [vmem:[#allocation3 + $0x10] sm:$0xff] %v533
        %v536 = vld [vmem:[#allocation3 + $0x7] sm:$0xff]
        %v537 = vld [vmem:[#allocation3 + $0xf] sm:$0xff]
        %v538 = vld [vmem:[#allocation3 + $0x8] sm:$0xff]
        %v539 = vld [vmem:[#allocation3 + $0x10] sm:$0xff]
        %v540 = vpack.c.bf16 %v537, %v536
        %v541 = vpack.c.bf16 %v539, %v538
        %v542 = vld [vmem:[#allocation9] sm:$0xf]
        %v543 = vld [vmem:[#allocation9 + $0x4] sm:$0xf]
        %v544 = vld [vmem:[#allocation9 + $0x8] sm:$0xf]
        %v545 = vld [vmem:[#allocation9 + $0xc] sm:$0xf]
        %v546 = vld [vmem:[#allocation9 + $0x10] sm:$0xf]
        %v547 = vld [vmem:[#allocation9 + $0x14] sm:$0xf]
        %v548 = vld [vmem:[#allocation9 + $0x18] sm:$0xf]
        %v549 = vld [vmem:[#allocation9 + $0x1c] sm:$0xf]
        %v550 = vld [vmem:[#allocation9 + $0x20] sm:$0xf]
        %v551 = vld [vmem:[#allocation9 + $0x24] sm:$0xf]
        %v552 = vld [vmem:[#allocation9 + $0x28] sm:$0xf]
        %v553 = vld [vmem:[#allocation9 + $0x2c] sm:$0xf]
        %v554 = vld [vmem:[#allocation9 + $0x30] sm:$0xf]
        %v555 = vld [vmem:[#allocation9 + $0x34] sm:$0xf]
        %v556 = vld [vmem:[#allocation9 + $0x38] sm:$0xf]
        %v557 = vld [vmem:[#allocation9 + $0x3c] sm:$0xf]
        %v558 = vld [vmem:[#allocation9 + $0x40] sm:$0xf]
        %v559 = vld [vmem:[#allocation9 + $0x44] sm:$0xf]
        %v560 = vld [vmem:[#allocation9 + $0x48] sm:$0xf]
        %v561 = vld [vmem:[#allocation9 + $0x4c] sm:$0xf]
        %v562 = vld [vmem:[#allocation9 + $0x50] sm:$0xf]
        %v563 = vld [vmem:[#allocation9 + $0x54] sm:$0xf]
        %v564 = vld [vmem:[#allocation9 + $0x58] sm:$0xf]
        %v565 = vld [vmem:[#allocation9 + $0x5c] sm:$0xf]
        %v566 = vld [vmem:[#allocation9 + $0x60] sm:$0xf]
        %v567 = vld [vmem:[#allocation9 + $0x64] sm:$0xf]
        %v568 = vld [vmem:[#allocation9 + $0x68] sm:$0xf]
        %v569 = vld [vmem:[#allocation9 + $0x6c] sm:$0xf]
        %v570 = vld [vmem:[#allocation9 + $0x70] sm:$0xf]
        %v571 = vld [vmem:[#allocation9 + $0x74] sm:$0xf]
        %v572 = vld [vmem:[#allocation9 + $0x78] sm:$0xf]
        %v573 = vld [vmem:[#allocation9 + $0x7c] sm:$0xf]
        %v574 = vld [vmem:[%s4] sm:$0x1]
        %v576 = vlaneseq
        %v577 = vshrl.u32 %v576, 7
        %v578 = vsub.s32 0, %v577
        %v579 = vrot.slane %v574, %v578
        %v613 = vunpack.c.l.b16 %v542
        %v614 = vunpack.c.l.b16 %v543
        %v615 = vunpack.c.l.b16 %v544
        %v616 = vunpack.c.l.b16 %v545
        %v617 = vunpack.c.l.b16 %v546
        %v618 = vunpack.c.l.b16 %v547
        %v619 = vunpack.c.l.b16 %v548
        %v620 = vunpack.c.l.b16 %v549
        %v621 = vunpack.c.l.b16 %v550
        %v622 = vunpack.c.l.b16 %v551
        %v623 = vunpack.c.l.b16 %v552
        %v624 = vunpack.c.l.b16 %v553
        %v625 = vunpack.c.l.b16 %v554
        %v626 = vunpack.c.l.b16 %v555
        %v627 = vunpack.c.l.b16 %v556
        %v628 = vunpack.c.l.b16 %v557
        %v629 = vunpack.c.l.b16 %v558
        %v630 = vunpack.c.l.b16 %v559
        %v631 = vunpack.c.l.b16 %v560
        %v632 = vunpack.c.l.b16 %v561
        %v633 = vunpack.c.l.b16 %v562
        %v634 = vunpack.c.l.b16 %v563
        %v635 = vunpack.c.l.b16 %v564
        %v636 = vunpack.c.l.b16 %v565
        %v637 = vunpack.c.l.b16 %v566
        %v638 = vunpack.c.l.b16 %v567
        %v639 = vunpack.c.l.b16 %v568
        %v640 = vunpack.c.l.b16 %v569
        %v641 = vunpack.c.l.b16 %v570
        %v642 = vunpack.c.l.b16 %v571
        %v643 = vunpack.c.l.b16 %v572
        %v644 = vunpack.c.l.b16 %v573
        %v645 = vpack.c.b16 %v614, %v613
        %v646 = vpack.c.b16 %v616, %v615
        %v647 = vpack.c.b16 %v618, %v617
        %v648 = vpack.c.b16 %v620, %v619
        %v649 = vpack.c.b16 %v622, %v621
        %v650 = vpack.c.b16 %v624, %v623
        %v651 = vpack.c.b16 %v626, %v625
        %v652 = vpack.c.b16 %v628, %v627
        %v653 = vpack.c.b16 %v630, %v629
        %v654 = vpack.c.b16 %v632, %v631
        %v655 = vpack.c.b16 %v634, %v633
        %v656 = vpack.c.b16 %v636, %v635
        %v657 = vpack.c.b16 %v638, %v637
        %v658 = vpack.c.b16 %v640, %v639
        %v659 = vpack.c.b16 %v642, %v641
        %v660 = vpack.c.b16 %v644, %v643
        %677 = vmatprep.subr.bf16.mxu0 0
        %678 = vmatpush1.bf16.msra.mxu0 %v645
        %679 = vmatprep.subr.bf16.mxu0 0
        %680 = vmatpush1.bf16.msra.mxu0 %v646
        %681 = vmatprep.subr.bf16.mxu0 0
        %682 = vmatpush1.bf16.msra.mxu0 %v647
        %683 = vmatprep.subr.bf16.mxu0 0
        %684 = vmatpush1.bf16.msra.mxu0 %v648
        %685 = vmatprep.subr.bf16.mxu0 0
        %686 = vmatpush1.bf16.msra.mxu0 %v649
        %687 = vmatprep.subr.bf16.mxu0 0
        %688 = vmatpush1.bf16.msra.mxu0 %v650
        %689 = vmatprep.subr.bf16.mxu0 0
        %690 = vmatpush1.bf16.msra.mxu0 %v651
        %691 = vmatprep.subr.bf16.mxu0 0
        %692 = vmatpush1.bf16.msra.mxu0 %v652
        %693 = vmatprep.subr.bf16.mxu0 0
        %694 = vmatpush1.bf16.msra.mxu0 %v653
        %695 = vmatprep.subr.bf16.mxu0 0
        %696 = vmatpush1.bf16.msra.mxu0 %v654
        %697 = vmatprep.subr.bf16.mxu0 0
        %698 = vmatpush1.bf16.msra.mxu0 %v655
        %699 = vmatprep.subr.bf16.mxu0 0
        %700 = vmatpush1.bf16.msra.mxu0 %v656
        %701 = vmatprep.subr.bf16.mxu0 0
        %702 = vmatpush1.bf16.msra.mxu0 %v657
        %703 = vmatprep.subr.bf16.mxu0 0
        %704 = vmatpush1.bf16.msra.mxu0 %v658
        %705 = vmatprep.subr.bf16.mxu0 0
        %706 = vmatpush1.bf16.msra.mxu0 %v659
        %707 = vmatprep.subr.bf16.mxu0 0
        %708 = vmatpush1.bf16.msra.mxu0 %v660
        %709 = vmatprep.mubr.bf16.mxu0 %v541
        %710 = vmatmul.mubr.bf16.gmra.mrb[0].mxu0 %v540
        %v711 = vpop.f32.mrb[0].mxu0
        %v712 = vadd.f32 %v579, %v711
        %v713 = vpop.f32.mrb[0].mxu0
        %v714 = vpop.f32.mrb[0].mxu0
        %v715 = vadd.f32 %v579, %v714
        %v716 = vpop.f32.mrb[0].mxu0
        %717 = vdwg.mxu0
        %v718 = vmax.f32 %v712, 0.0
        %v719 = vmax.f32 %v715, 0.0
        %v720 = vld [vmem:[#allocation2 + $0x8] sm:$0xff]
        %v721 = vld [vmem:[#allocation2 + $0x10] sm:$0xff]
        %v722 = vpack.c.bf16 %v721, %v720
        %v723 = vld [vmem:[#allocation10] sm:$0xf]
        %v724 = vld [vmem:[#allocation10 + $0x4] sm:$0xf]
        %v725 = vld [vmem:[#allocation10 + $0x8] sm:$0xf]
        %v726 = vld [vmem:[#allocation10 + $0xc] sm:$0xf]
        %v727 = vld [vmem:[#allocation10 + $0x10] sm:$0xf]
        %v728 = vld [vmem:[#allocation10 + $0x14] sm:$0xf]
        %v729 = vld [vmem:[#allocation10 + $0x18] sm:$0xf]
        %v730 = vld [vmem:[#allocation10 + $0x1c] sm:$0xf]
        %v731 = vld [vmem:[#allocation10 + $0x20] sm:$0xf]
        %v732 = vld [vmem:[#allocation10 + $0x24] sm:$0xf]
        %v733 = vld [vmem:[#allocation10 + $0x28] sm:$0xf]
        %v734 = vld [vmem:[#allocation10 + $0x2c] sm:$0xf]
        %v735 = vld [vmem:[#allocation10 + $0x30] sm:$0xf]
        %v736 = vld [vmem:[#allocation10 + $0x34] sm:$0xf]
        %v737 = vld [vmem:[#allocation10 + $0x38] sm:$0xf]
        %v738 = vld [vmem:[#allocation10 + $0x3c] sm:$0xf]
        %v739 = vld [vmem:[%s6] sm:$0x1]
        %v741 = vlaneseq
        %v742 = vshrl.u32 %v741, 7
        %v743 = vsub.s32 0, %v742
        %v744 = vrot.slane %v739, %v743
        %v762 = vunpack.c.l.b16 %v723
        %v763 = vunpack.c.l.b16 %v724
        %v764 = vunpack.c.l.b16 %v725
        %v765 = vunpack.c.l.b16 %v726
        %v766 = vunpack.c.l.b16 %v727
        %v767 = vunpack.c.l.b16 %v728
        %v768 = vunpack.c.l.b16 %v729
        %v769 = vunpack.c.l.b16 %v730
        %v770 = vunpack.c.l.b16 %v731
        %v771 = vunpack.c.l.b16 %v732
        %v772 = vunpack.c.l.b16 %v733
        %v773 = vunpack.c.l.b16 %v734
        %v774 = vunpack.c.l.b16 %v735
        %v775 = vunpack.c.l.b16 %v736
        %v776 = vunpack.c.l.b16 %v737
        %v777 = vunpack.c.l.b16 %v738
        %v778 = vpack.c.b16 %v763, %v762
        %v779 = vpack.c.b16 %v765, %v764
        %v780 = vpack.c.b16 %v767, %v766
        %v781 = vpack.c.b16 %v769, %v768
        %v782 = vpack.c.b16 %v771, %v770
        %v783 = vpack.c.b16 %v773, %v772
        %v784 = vpack.c.b16 %v775, %v774
        %v785 = vpack.c.b16 %v777, %v776
        %794 = vmatprep.subr.bf16.mxu0 0
        %795 = vmatpush1.bf16.msra.mxu0 %v778
        %796 = vmatprep.subr.bf16.mxu0 0
        %797 = vmatpush1.bf16.msra.mxu0 %v779
        %798 = vmatprep.subr.bf16.mxu0 0
        %799 = vmatpush1.bf16.msra.mxu0 %v780
        %800 = vmatprep.subr.bf16.mxu0 0
        %801 = vmatpush1.bf16.msra.mxu0 %v781
        %802 = vmatprep.subr.bf16.mxu0 0
        %803 = vmatpush1.bf16.msra.mxu0 %v782
        %804 = vmatprep.subr.bf16.mxu0 0
        %805 = vmatpush1.bf16.msra.mxu0 %v783
        %806 = vmatprep.subr.bf16.mxu0 0
        %807 = vmatpush1.bf16.msra.mxu0 %v784
        %808 = vmatprep.subr.bf16.mxu0 0
        %809 = vmatpush1.bf16.msra.mxu0 %v785
        %810 = vmatprep.subr.bf16.mxu0 0
        %811 = vmatpush1.bf16.msra.mxu0 0
        %812 = vmatprep.subr.bf16.mxu0 0
        %813 = vmatpush1.bf16.msra.mxu0 0
        %814 = vmatprep.subr.bf16.mxu0 0
        %815 = vmatpush1.bf16.msra.mxu0 0
        %816 = vmatprep.subr.bf16.mxu0 0
        %817 = vmatpush1.bf16.msra.mxu0 0
        %818 = vmatprep.subr.bf16.mxu0 0
        %819 = vmatpush1.bf16.msra.mxu0 0
        %820 = vmatprep.subr.bf16.mxu0 0
        %821 = vmatpush1.bf16.msra.mxu0 0
        %822 = vmatprep.subr.bf16.mxu0 0
        %823 = vmatpush1.bf16.msra.mxu0 0
        %824 = vmatprep.subr.bf16.mxu0 0
        %825 = vmatpush1.bf16.msra.mxu0 0
        %826 = vmatprep.mubr.bf16.mxu0 0
        %827 = vmatmul.mubr.bf16.gmra.mrb[0].mxu0 %v722
        %v828 = vpop.f32.mrb[0].mxu0
        %v829 = vadd.f32 %v744, %v828
        %v830 = vpop.f32.mrb[0].mxu0
        %v831 = vpop.f32.mrb[0].mxu0
        %v832 = vadd.f32 %v744, %v831
        %v833 = vpop.f32.mrb[0].mxu0
        %834 = vdwg.mxu0
        %v835 = vadd.f32 %v718, %v829
        %v836 = vadd.f32 %v719, %v832
        %v837 = vmax.f32 %v835, 0.0
        %v838 = vmax.f32 %v836, 0.0
        %839 = vst [vmem:[#allocation2 + $0x8] sm:$0xff] %v837
        %840 = vst [vmem:[#allocation2 + $0x10] sm:$0xff] %v838
        %v841 = vld [vmem:[#allocation2 + $0x6] sm:$0xff]
        %v842 = vld [vmem:[#allocation2 + $0xe] sm:$0xff]
        %v843 = vld [vmem:[#allocation2 + $0x8] sm:$0xff]
        %v844 = vld [vmem:[#allocation2 + $0x10] sm:$0xff]
        %v845 = vpack.c.bf16 %v842, %v841
        %v846 = vpack.c.bf16 %v844, %v843
        %s847 = scalar_lea.vmem [#allocation7], 128
        %v848 = vld [vmem:[%s847] sm:$0xf]
        %v849 = vld [vmem:[%s847 + $0x4] sm:$0xf]
        %v850 = vld [vmem:[%s847 + $0x8] sm:$0xf]
        %v851 = vld [vmem:[%s847 + $0xc] sm:$0xf]
        %v852 = vld [vmem:[%s847 + $0x10] sm:$0xf]
        %v853 = vld [vmem:[%s847 + $0x14] sm:$0xf]
        %v854 = vld [vmem:[%s847 + $0x18] sm:$0xf]
        %v855 = vld [vmem:[%s847 + $0x1c] sm:$0xf]
        %v856 = vld [vmem:[%s847 + $0x20] sm:$0xf]
        %v857 = vld [vmem:[%s847 + $0x24] sm:$0xf]
        %v858 = vld [vmem:[%s847 + $0x28] sm:$0xf]
        %v859 = vld [vmem:[%s847 + $0x2c] sm:$0xf]
        %v860 = vld [vmem:[%s847 + $0x30] sm:$0xf]
        %v861 = vld [vmem:[%s847 + $0x34] sm:$0xf]
        %v862 = vld [vmem:[%s847 + $0x38] sm:$0xf]
        %v863 = vld [vmem:[%s847 + $0x3c] sm:$0xf]
        %v864 = vld [vmem:[%s847 + $0x40] sm:$0xf]
        %v865 = vld [vmem:[%s847 + $0x44] sm:$0xf]
        %v866 = vld [vmem:[%s847 + $0x48] sm:$0xf]
        %v867 = vld [vmem:[%s847 + $0x4c] sm:$0xf]
        %v868 = vld [vmem:[%s847 + $0x50] sm:$0xf]
        %v869 = vld [vmem:[%s847 + $0x54] sm:$0xf]
        %v870 = vld [vmem:[%s847 + $0x58] sm:$0xf]
        %v871 = vld [vmem:[%s847 + $0x5c] sm:$0xf]
        %v872 = vld [vmem:[%s847 + $0x60] sm:$0xf]
        %v873 = vld [vmem:[%s847 + $0x64] sm:$0xf]
        %v874 = vld [vmem:[%s847 + $0x68] sm:$0xf]
        %v875 = vld [vmem:[%s847 + $0x6c] sm:$0xf]
        %v876 = vld [vmem:[%s847 + $0x70] sm:$0xf]
        %v877 = vld [vmem:[%s847 + $0x74] sm:$0xf]
        %v878 = vld [vmem:[%s847 + $0x78] sm:$0xf]
        %v879 = vld [vmem:[%s847 + $0x7c] sm:$0xf]
        %s880 = scalar_lea.vmem %s2, 1
        %v881 = vld [vmem:[%s880] sm:$0x1]
        %v883 = vlaneseq
        %v884 = vshrl.u32 %v883, 7
        %v885 = vsub.s32 0, %v884
        %v886 = vrot.slane %v881, %v885
        %v920 = vunpack.c.l.b16 %v848
        %v921 = vunpack.c.l.b16 %v849
        %v922 = vunpack.c.l.b16 %v850
        %v923 = vunpack.c.l.b16 %v851
        %v924 = vunpack.c.l.b16 %v852
        %v925 = vunpack.c.l.b16 %v853
        %v926 = vunpack.c.l.b16 %v854
        %v927 = vunpack.c.l.b16 %v855
        %v928 = vunpack.c.l.b16 %v856
        %v929 = vunpack.c.l.b16 %v857
        %v930 = vunpack.c.l.b16 %v858
        %v931 = vunpack.c.l.b16 %v859
        %v932 = vunpack.c.l.b16 %v860
        %v933 = vunpack.c.l.b16 %v861
        %v934 = vunpack.c.l.b16 %v862
        %v935 = vunpack.c.l.b16 %v863
        %v936 = vunpack.c.l.b16 %v864
        %v937 = vunpack.c.l.b16 %v865
        %v938 = vunpack.c.l.b16 %v866
        %v939 = vunpack.c.l.b16 %v867
        %v940 = vunpack.c.l.b16 %v868
        %v941 = vunpack.c.l.b16 %v869
        %v942 = vunpack.c.l.b16 %v870
        %v943 = vunpack.c.l.b16 %v871
        %v944 = vunpack.c.l.b16 %v872
        %v945 = vunpack.c.l.b16 %v873
        %v946 = vunpack.c.l.b16 %v874
        %v947 = vunpack.c.l.b16 %v875
        %v948 = vunpack.c.l.b16 %v876
        %v949 = vunpack.c.l.b16 %v877
        %v950 = vunpack.c.l.b16 %v878
        %v951 = vunpack.c.l.b16 %v879
        %v952 = vpack.c.b16 %v921, %v920
        %v953 = vpack.c.b16 %v923, %v922
        %v954 = vpack.c.b16 %v925, %v924
        %v955 = vpack.c.b16 %v927, %v926
        %v956 = vpack.c.b16 %v929, %v928
        %v957 = vpack.c.b16 %v931, %v930
        %v958 = vpack.c.b16 %v933, %v932
        %v959 = vpack.c.b16 %v935, %v934
        %v960 = vpack.c.b16 %v937, %v936
        %v961 = vpack.c.b16 %v939, %v938
        %v962 = vpack.c.b16 %v941, %v940
        %v963 = vpack.c.b16 %v943, %v942
        %v964 = vpack.c.b16 %v945, %v944
        %v965 = vpack.c.b16 %v947, %v946
        %v966 = vpack.c.b16 %v949, %v948
        %v967 = vpack.c.b16 %v951, %v950
        %984 = vmatprep.subr.bf16.mxu0 0
        %985 = vmatpush1.bf16.msra.mxu0 %v952
        %986 = vmatprep.subr.bf16.mxu0 0
        %987 = vmatpush1.bf16.msra.mxu0 %v953
        %988 = vmatprep.subr.bf16.mxu0 0
        %989 = vmatpush1.bf16.msra.mxu0 %v954
        %990 = vmatprep.subr.bf16.mxu0 0
        %991 = vmatpush1.bf16.msra.mxu0 %v955
        %992 = vmatprep.subr.bf16.mxu0 0
        %993 = vmatpush1.bf16.msra.mxu0 %v956
        %994 = vmatprep.subr.bf16.mxu0 0
        %995 = vmatpush1.bf16.msra.mxu0 %v957
        %996 = vmatprep.subr.bf16.mxu0 0
        %997 = vmatpush1.bf16.msra.mxu0 %v958
        %998 = vmatprep.subr.bf16.mxu0 0
        %999 = vmatpush1.bf16.msra.mxu0 %v959
        %1000 = vmatprep.subr.bf16.mxu0 0
        %1001 = vmatpush1.bf16.msra.mxu0 %v960
        %1002 = vmatprep.subr.bf16.mxu0 0
        %1003 = vmatpush1.bf16.msra.mxu0 %v961
        %1004 = vmatprep.subr.bf16.mxu0 0
        %1005 = vmatpush1.bf16.msra.mxu0 %v962
        %1006 = vmatprep.subr.bf16.mxu0 0
        %1007 = vmatpush1.bf16.msra.mxu0 %v963
        %1008 = vmatprep.subr.bf16.mxu0 0
        %1009 = vmatpush1.bf16.msra.mxu0 %v964
        %1010 = vmatprep.subr.bf16.mxu0 0
        %1011 = vmatpush1.bf16.msra.mxu0 %v965
        %1012 = vmatprep.subr.bf16.mxu0 0
        %1013 = vmatpush1.bf16.msra.mxu0 %v966
        %1014 = vmatprep.subr.bf16.mxu0 0
        %1015 = vmatpush1.bf16.msra.mxu0 %v967
        %1016 = vmatprep.mubr.bf16.mxu0 %v846
        %1017 = vmatmul.mubr.bf16.gmra.mrb[0].mxu0 %v845
        %v1018 = vpop.f32.mrb[0].mxu0
        %v1019 = vadd.f32 %v886, %v1018
        %v1020 = vpop.f32.mrb[0].mxu0
        %v1021 = vpop.f32.mrb[0].mxu0
        %v1022 = vadd.f32 %v886, %v1021
        %v1023 = vpop.f32.mrb[0].mxu0
        %1024 = vdwg.mxu0
        %v1025 = vmax.f32 %v1019, 0.0
        %v1026 = vmax.f32 %v1022, 0.0
        %1027 = vst [vmem:[#allocation3 + $0x8] sm:$0xff] %v1025
        %1028 = vst [vmem:[#allocation3 + $0x10] sm:$0xff] %v1026
        %v1029 = vld [vmem:[#allocation3 + $0x6] sm:$0xff]
        %v1030 = vld [vmem:[#allocation3 + $0xe] sm:$0xff]
        %v1031 = vld [vmem:[#allocation3 + $0x8] sm:$0xff]
        %v1032 = vld [vmem:[#allocation3 + $0x10] sm:$0xff]
        %v1033 = vpack.c.bf16 %v1030, %v1029
        %v1034 = vpack.c.bf16 %v1032, %v1031
        %s1035 = scalar_lea.vmem [#allocation9], 128
        %v1036 = vld [vmem:[%s1035] sm:$0xf]
        %v1037 = vld [vmem:[%s1035 + $0x4] sm:$0xf]
        %v1038 = vld [vmem:[%s1035 + $0x8] sm:$0xf]
        %v1039 = vld [vmem:[%s1035 + $0xc] sm:$0xf]
        %v1040 = vld [vmem:[%s1035 + $0x10] sm:$0xf]
        %v1041 = vld [vmem:[%s1035 + $0x14] sm:$0xf]
        %v1042 = vld [vmem:[%s1035 + $0x18] sm:$0xf]
        %v1043 = vld [vmem:[%s1035 + $0x1c] sm:$0xf]
        %v1044 = vld [vmem:[%s1035 + $0x20] sm:$0xf]
        %v1045 = vld [vmem:[%s1035 + $0x24] sm:$0xf]
        %v1046 = vld [vmem:[%s1035 + $0x28] sm:$0xf]
        %v1047 = vld [vmem:[%s1035 + $0x2c] sm:$0xf]
        %v1048 = vld [vmem:[%s1035 + $0x30] sm:$0xf]
        %v1049 = vld [vmem:[%s1035 + $0x34] sm:$0xf]
        %v1050 = vld [vmem:[%s1035 + $0x38] sm:$0xf]
        %v1051 = vld [vmem:[%s1035 + $0x3c] sm:$0xf]
        %v1052 = vld [vmem:[%s1035 + $0x40] sm:$0xf]
        %v1053 = vld [vmem:[%s1035 + $0x44] sm:$0xf]
        %v1054 = vld [vmem:[%s1035 + $0x48] sm:$0xf]
        %v1055 = vld [vmem:[%s1035 + $0x4c] sm:$0xf]
        %v1056 = vld [vmem:[%s1035 + $0x50] sm:$0xf]
        %v1057 = vld [vmem:[%s1035 + $0x54] sm:$0xf]
        %v1058 = vld [vmem:[%s1035 + $0x58] sm:$0xf]
        %v1059 = vld [vmem:[%s1035 + $0x5c] sm:$0xf]
        %v1060 = vld [vmem:[%s1035 + $0x60] sm:$0xf]
        %v1061 = vld [vmem:[%s1035 + $0x64] sm:$0xf]
        %v1062 = vld [vmem:[%s1035 + $0x68] sm:$0xf]
        %v1063 = vld [vmem:[%s1035 + $0x6c] sm:$0xf]
        %v1064 = vld [vmem:[%s1035 + $0x70] sm:$0xf]
        %v1065 = vld [vmem:[%s1035 + $0x74] sm:$0xf]
        %v1066 = vld [vmem:[%s1035 + $0x78] sm:$0xf]
        %v1067 = vld [vmem:[%s1035 + $0x7c] sm:$0xf]
        %s1068 = scalar_lea.vmem %s4, 1
        %v1069 = vld [vmem:[%s1068] sm:$0x1]
        %v1071 = vlaneseq
        %v1072 = vshrl.u32 %v1071, 7
        %v1073 = vsub.s32 0, %v1072
        %v1074 = vrot.slane %v1069, %v1073
        %v1108 = vunpack.c.l.b16 %v1036
        %v1109 = vunpack.c.l.b16 %v1037
        %v1110 = vunpack.c.l.b16 %v1038
        %v1111 = vunpack.c.l.b16 %v1039
        %v1112 = vunpack.c.l.b16 %v1040
        %v1113 = vunpack.c.l.b16 %v1041
        %v1114 = vunpack.c.l.b16 %v1042
        %v1115 = vunpack.c.l.b16 %v1043
        %v1116 = vunpack.c.l.b16 %v1044
        %v1117 = vunpack.c.l.b16 %v1045
        %v1118 = vunpack.c.l.b16 %v1046
        %v1119 = vunpack.c.l.b16 %v1047
        %v1120 = vunpack.c.l.b16 %v1048
        %v1121 = vunpack.c.l.b16 %v1049
        %v1122 = vunpack.c.l.b16 %v1050
        %v1123 = vunpack.c.l.b16 %v1051
        %v1124 = vunpack.c.l.b16 %v1052
        %v1125 = vunpack.c.l.b16 %v1053
        %v1126 = vunpack.c.l.b16 %v1054
        %v1127 = vunpack.c.l.b16 %v1055
        %v1128 = vunpack.c.l.b16 %v1056
        %v1129 = vunpack.c.l.b16 %v1057
        %v1130 = vunpack.c.l.b16 %v1058
        %v1131 = vunpack.c.l.b16 %v1059
        %v1132 = vunpack.c.l.b16 %v1060
        %v1133 = vunpack.c.l.b16 %v1061
        %v1134 = vunpack.c.l.b16 %v1062
        %v1135 = vunpack.c.l.b16 %v1063
        %v1136 = vunpack.c.l.b16 %v1064
        %v1137 = vunpack.c.l.b16 %v1065
        %v1138 = vunpack.c.l.b16 %v1066
        %v1139 = vunpack.c.l.b16 %v1067
        %v1140 = vpack.c.b16 %v1109, %v1108
        %v1141 = vpack.c.b16 %v1111, %v1110
        %v1142 = vpack.c.b16 %v1113, %v1112
        %v1143 = vpack.c.b16 %v1115, %v1114
        %v1144 = vpack.c.b16 %v1117, %v1116
        %v1145 = vpack.c.b16 %v1119, %v1118
        %v1146 = vpack.c.b16 %v1121, %v1120
        %v1147 = vpack.c.b16 %v1123, %v1122
        %v1148 = vpack.c.b16 %v1125, %v1124
        %v1149 = vpack.c.b16 %v1127, %v1126
        %v1150 = vpack.c.b16 %v1129, %v1128
        %v1151 = vpack.c.b16 %v1131, %v1130
        %v1152 = vpack.c.b16 %v1133, %v1132
        %v1153 = vpack.c.b16 %v1135, %v1134
        %v1154 = vpack.c.b16 %v1137, %v1136
        %v1155 = vpack.c.b16 %v1139, %v1138
        %1172 = vmatprep.subr.bf16.mxu0 0
        %1173 = vmatpush1.bf16.msra.mxu0 %v1140
        %1174 = vmatprep.subr.bf16.mxu0 0
        %1175 = vmatpush1.bf16.msra.mxu0 %v1141
        %1176 = vmatprep.subr.bf16.mxu0 0
        %1177 = vmatpush1.bf16.msra.mxu0 %v1142
        %1178 = vmatprep.subr.bf16.mxu0 0
        %1179 = vmatpush1.bf16.msra.mxu0 %v1143
        %1180 = vmatprep.subr.bf16.mxu0 0
        %1181 = vmatpush1.bf16.msra.mxu0 %v1144
        %1182 = vmatprep.subr.bf16.mxu0 0
        %1183 = vmatpush1.bf16.msra.mxu0 %v1145
        %1184 = vmatprep.subr.bf16.mxu0 0
        %1185 = vmatpush1.bf16.msra.mxu0 %v1146
        %1186 = vmatprep.subr.bf16.mxu0 0
        %1187 = vmatpush1.bf16.msra.mxu0 %v1147
        %1188 = vmatprep.subr.bf16.mxu0 0
        %1189 = vmatpush1.bf16.msra.mxu0 %v1148
        %1190 = vmatprep.subr.bf16.mxu0 0
        %1191 = vmatpush1.bf16.msra.mxu0 %v1149
        %1192 = vmatprep.subr.bf16.mxu0 0
        %1193 = vmatpush1.bf16.msra.mxu0 %v1150
        %1194 = vmatprep.subr.bf16.mxu0 0
        %1195 = vmatpush1.bf16.msra.mxu0 %v1151
        %1196 = vmatprep.subr.bf16.mxu0 0
        %1197 = vmatpush1.bf16.msra.mxu0 %v1152
        %1198 = vmatprep.subr.bf16.mxu0 0
        %1199 = vmatpush1.bf16.msra.mxu0 %v1153
        %1200 = vmatprep.subr.bf16.mxu0 0
        %1201 = vmatpush1.bf16.msra.mxu0 %v1154
        %1202 = vmatprep.subr.bf16.mxu0 0
        %1203 = vmatpush1.bf16.msra.mxu0 %v1155
        %1204 = vmatprep.mubr.bf16.mxu0 %v1034
        %1205 = vmatmul.mubr.bf16.gmra.mrb[0].mxu0 %v1033
        %v1206 = vpop.f32.mrb[0].mxu0
        %v1207 = vadd.f32 %v1074, %v1206
        %v1208 = vpop.f32.mrb[0].mxu0
        %v1209 = vpop.f32.mrb[0].mxu0
        %v1210 = vadd.f32 %v1074, %v1209
        %v1211 = vpop.f32.mrb[0].mxu0
        %1212 = vdwg.mxu0
        %v1213 = vmax.f32 %v1207, 0.0
        %v1214 = vmax.f32 %v1210, 0.0
        %v1215 = vld [vmem:[#allocation2 + $0x8] sm:$0xff]
        %v1216 = vld [vmem:[#allocation2 + $0x10] sm:$0xff]
        %v1217 = vadd.f32 %v1213, %v1215
        %v1218 = vadd.f32 %v1214, %v1216
        %v1219 = vmax.f32 %v1217, 0.0
        %v1220 = vmax.f32 %v1218, 0.0
        %v1221 = vpack.c.bf16 %v1220, %v1219
        %v1223 = vunpack.c.l.b16 %v1221
        %v1224 = vunpack.c.h.b16 %v1221
        %v1225 = vpack.c.b16 %v1223, %v1223
        %v1226 = vpack.c.b16 %v1224, %v1224
        %1229 = vst [vmem:[%s340] sm:$0xf] %v1225
        %1230 = vst [vmem:[%s340 + $0x4] sm:$0xf] %v1226
        %s1231 = sand.u32 %s186, 1
        %s1232 = scalar_lea.sflag [#allocation6], %s1231
        %s1233 = sand.u32 %s186, 1
        %s1234 = smul.addr %s1233, 8
        %s1235 = scalar_lea.vmem [#allocation12], %s1234
        // Predicated region
        $region65: #{tpu_custom_call.1} parent=47 // pred_check
          %p1236 = pneg %p196
        $region66: #{tpu_custom_call.1} parent=47 // pred_check_branch
          %1238 = sbr.rel (%p1236) target = $region68
        $region67: #{tpu_custom_call.1} parent=47 // pred_region
          %s1240 = ssub.s32 128, 128
          %1241 = vsyncadd %s1232, %s1240
          %s1242 = smul.addr %s26, 2
          %s1243 = smul.addr %s1242, 64
          %s1244 = scalar_lea.hbm %s7, %s1243
          %s1245 = sshll.u32 %s1235, 4
          %s1246 = int_to_ptr.vmem [resolvable:$true] %s1245
          %1251 = dma.vmem_to_hbm [thread:$0]  %s1246, 128, %s1244, %s1232, 64, 64, 4
        $region68: #{tpu_custom_call.1} parent=47 // pred_fallthru
          _
      $region48: #{tpu_custom_call.1} parent=5 // pred_fallthru
        _
      %p1252 = scmp.le.s32.totalorder 2, %s21
      // Predicated region
      $region69: #{tpu_custom_call.1} parent=5 // pred_check
        %p1253 = pneg %p1252
      $region70: #{tpu_custom_call.1} parent=5 // pred_check_branch
        %1255 = sbr.rel (%p1253) target = $region72
      $region71: #{tpu_custom_call.1} parent=5 // pred_region
        %s1256 = ssub.s32 %s21, 2
        // Predicated region
        $region73: #{tpu_custom_call.1} parent=71 // pred_check
          %p1257 = pneg %p202
        $region74: #{tpu_custom_call.1} parent=71 // pred_check_branch
          %1259 = sbr.rel (%p1257) target = $region76
        $region75: #{tpu_custom_call.1} parent=71 // pred_region
          %s1260 = sand.u32 %s187, 1
          %s1261 = scalar_lea.sflag [#allocation6], %s1260
          %s1262 = sand.u32 %s187, 1
          %s1263 = smul.addr %s1262, 8
          %s1264 = scalar_lea.vmem [#allocation12], %s1263
          %1265 = dma.done %s1261, 128
        $region76: #{tpu_custom_call.1} parent=71 // pred_fallthru
          _
      $region72: #{tpu_custom_call.1} parent=5 // pred_fallthru
        _
    $region6: #{tpu_custom_call.1} parent=1 // loop_footer
      %s25 = sadd.s32 1, %s21
    $region7: #{tpu_custom_call.1} parent=1 // loop_footer_branch
      %20 = sbr.rel target = $region3
    $region8: #{tpu_custom_call.1} parent=1 // loop_exit
      _
    %1266 = vsyncpa [#allocation5], 1
    %s1267 = scalar_lea.sflag [#allocation5], 1
    %1268 = vsyncpa %s1267, 1
    %1269 = vsyncpa [#allocation8], 1
    %1270 = vsyncpa [#allocation11], 1
    %1271 = vsyncpa [#allocation6], 1
    %s1272 = scalar_lea.sflag [#allocation6], 1
    %1273 = vsyncpa %s1272, 1

// kernel: tpu_custom_call.1
$region0: #{tpu_custom_call.1}
  #allocation0 [shape = 'u32[]', space=smem, size = 0x4, offset = 0x4, fixed_abs, tag = 'smem constant byte address 0x4 - core index']
  #allocation1 [shape = 'u32[144,128]{1,0:T(1,128)}', space=vmem, size = 0x12000, scoped, tag = 'internal scratch']
  #allocation2 [shape = 'f32[24,128]{1,0:T(8,128)}', space=vmem, size = 0x3000, scoped, tag = 'scratch operand']
  #allocation3 [shape = 'f32[24,128]{1,0:T(8,128)}', space=vmem, size = 0x3000, scoped, tag = 'scratch operand']
  %s0 = inlined_call_operand.hbm [shape: bf16[2,16,128], index: 0, kind: input, shape index: {}]
  %s1 = inlined_call_operand.hbm [shape: bf16[2,256,128], index: 1, kind: input, shape index: {}]
  %s2 = inlined_call_operand.vmem [shape: f32[2,1,128], index: 2, kind: input, shape index: {}]
  %s3 = inlined_call_operand.hbm [shape: bf16[2,256,128], index: 3, kind: input, shape index: {}]
  %s4 = inlined_call_operand.vmem [shape: f32[2,1,128], index: 4, kind: input, shape index: {}]
  %s5 = inlined_call_operand.hbm [shape: bf16[1,128,128], index: 5, kind: input, shape index: {}]
  %s6 = inlined_call_operand.vmem [shape: f32[1,1,128], index: 6, kind: input, shape index: {}]
  %s7 = inlined_call_operand.hbm [shape: bf16[2,16,128], index: 7, kind: output, shape index: {}]
  %s8 = sld [smem:[#allocation0]]
  $region77: #{tpu_custom_call.1} parent=0
    _
  %s10 = ssub.s32 1, %s8
  %s11 = scalar_select 0, %s10, %s8
  $region1: #{tpu_custom_call.1} parent=0
    #allocation4 [shape = 'u8[8192]{0}', space=vmem, size = 0x2000, scoped, tag = 'input window, operand 0']
    #allocation5 [shape = 's32[2]{0}', space=sflag, size = 0x8, scoped, tag = 'scoped memory for tpu_custom_call.1']
    #allocation6 [shape = 's32[2]{0}', space=sflag, size = 0x8, scoped, tag = 'scoped memory for tpu_custom_call.1']
    #allocation7 [shape = 'u8[131072]{0}', space=vmem, size = 0x20000, scoped, tag = 'input window, operand 1, single buffered']
    #allocation8 [shape = 's32[1]{0}', space=sflag, size = 0x4, scoped, tag = 'scoped memory for tpu_custom_call.1']
    #allocation9 [shape = 'u8[131072]{0}', space=vmem, size = 0x20000, scoped, tag = 'input window, operand 3, single buffered']
    #allocation10 [shape = 'u8[32768]{0}', space=vmem, size = 0x8000, scoped, tag = 'input window, operand 5, single buffered']
    #allocation11 [shape = 's32[1]{0}', space=sflag, size = 0x4, scoped, tag = 'scoped memory for tpu_custom_call.1']
    #allocation12 [shape = 'u8[8192]{0}', space=vmem, size = 0x2000, scoped, tag = 'output window, operand 0']
    %12 = vsyncpa [#allocation5], 0
    %s13 = scalar_lea.sflag [#allocation5], 1
    %14 = vsyncpa %s13, 0
    %15 = vsyncpa [#allocation8], 0
    %16 = vsyncpa [#allocation11], 0
    %17 = vsyncpa [#allocation6], 0
    %s18 = scalar_lea.sflag [#allocation6], 1
    %19 = vsyncpa %s18, 0
    loop: start=0, step=1, limit=4
    $region2: #{tpu_custom_call.1} parent=1 // loop_pre_header
      _
    $region3: #{tpu_custom_call.1} parent=1 // loop_header
      %s21 = sphi 0, %s25
      %p22 = scmp.ge.s32.totalorder %s21, 4
      %s31 = sphi 0, %s33
      %s34 = sphi 0, %s31
      %s35 = sphi 0, %s34
      %s51 = sphi 0, %s35
      %s55 = sphi 0, %s55
      %s57 = sphi 0, %s55
      %s58 = sphi 0, %s57
      %s72 = sphi 0, %s58
      %s76 = sphi 0, %s76
      %s78 = sphi 0, %s76
      %s79 = sphi 0, %s78
      %s93 = sphi 0, %s79
      %s97 = sphi 0, %s97
      %s99 = sphi 0, %s97
      %s100 = sphi 0, %s99
      %s114 = sphi 0, %s100
      %s118 = sphi 0, %s118
      %s120 = sphi 0, %s118
      %s121 = sphi 0, %s120
      %s135 = sphi 0, %s121
      %s139 = sphi 0, %s139
      %s141 = sphi 0, %s139
      %s142 = sphi 0, %s141
      %s156 = sphi 0, %s142
      %s160 = sphi 0, %s160
      %s162 = sphi 0, %s160
      %s163 = sphi 0, %s162
      %s177 = sphi 0, %s163
      %s183 = sphi 0, %s185
      %s186 = sphi 0, %s183
      %s187 = sphi 0, %s186
      %s203 = sphi 0, %s187
    $region4: #{tpu_custom_call.1} parent=1 // loop_header_branch
      %24 = sbr.rel (%p22) target = $region8
    $region5: #{tpu_custom_call.1} parent=1 // loop_body
      %s26 = ssub.s32 %s21, 1
      %s27 = ssub.s32 %s21, 2
      %s28 = sadd.s32 %s21, 1
      %s29 = ssub.s32 %s21, %s28
      %p30 = scmp.eq.s32.totalorder %s29, 0
      %s32 = sadd.s32 %s31, 1
      %s33 = scalar_select %p30, %s31, %s32
      %p36 = pneg %p30
      %p37 = scmp.eq.s32.totalorder %s21, 1
      %p38 = por %p36, %p37
      %p39 = scmp.ne.s32.totalorder %s31, %s34
      %p40 = scmp.eq.s32.totalorder %s21, 0
      %p41 = por %p39, %p40
      %p42 = scmp.ne.s32.totalorder %s31, %s34
      %p43 = scmp.eq.s32.totalorder %s26, 1
      %p44 = por %p42, %p43
      %p45 = scmp.ne.s32.totalorder %s34, %s35
      %p46 = scmp.eq.s32.totalorder %s26, 0
      %p47 = por %p45, %p46
      %p48 = scmp.ne.s32.totalorder %s34, %s35
      %p49 = scmp.eq.s32.totalorder %s27, 1
      %p50 = por %p48, %p49
      %p52 = scmp.ne.s32.totalorder %s35, %s51
      %p53 = scmp.eq.s32.totalorder %s27, 0
      %p54 = por %p52, %p53
      %s56 = sadd.s32 %s55, 1
      %p59 = scmp.eq.s32.totalorder %s21, 1
      %p60 = scmp.ne.s32.totalorder %s55, %s57
      %p61 = scmp.eq.s32.totalorder %s21, 0
      %p62 = por %p60, %p61
      %p63 = scmp.ne.s32.totalorder %s55, %s57
      %p64 = scmp.eq.s32.totalorder %s26, 1
      %p65 = por %p63, %p64
      %p66 = scmp.ne.s32.totalorder %s57, %s58
      %p67 = scmp.eq.s32.totalorder %s26, 0
      %p68 = por %p66, %p67
      %p69 = scmp.ne.s32.totalorder %s57, %s58
      %p70 = scmp.eq.s32.totalorder %s27, 1
      %p71 = por %p69, %p70
      %p73 = scmp.ne.s32.totalorder %s58, %s72
      %p74 = scmp.eq.s32.totalorder %s27, 0
      %p75 = por %p73, %p74
      %s77 = sadd.s32 %s76, 1
      %p80 = scmp.eq.s32.totalorder %s21, 1
      %p81 = scmp.ne.s32.totalorder %s76, %s78
      %p82 = scmp.eq.s32.totalorder %s21, 0
      %p83 = por %p81, %p82
      %p84 = scmp.ne.s32.totalorder %s76, %s78
      %p85 = scmp.eq.s32.totalorder %s26, 1
      %p86 = por %p84, %p85
      %p87 = scmp.ne.s32.totalorder %s78, %s79
      %p88 = scmp.eq.s32.totalorder %s26, 0
      %p89 = por %p87, %p88
      %p90 = scmp.ne.s32.totalorder %s78, %s79
      %p91 = scmp.eq.s32.totalorder %s27, 1
      %p92 = por %p90, %p91
      %p94 = scmp.ne.s32.totalorder %s79, %s93
      %p95 = scmp.eq.s32.totalorder %s27, 0
      %p96 = por %p94, %p95
      %s98 = sadd.s32 %s97, 1
      %p101 = scmp.eq.s32.totalorder %s21, 1
      %p102 = scmp.ne.s32.totalorder %s97, %s99
      %p103 = scmp.eq.s32.totalorder %s21, 0
      %p104 = por %p102, %p103
      %p105 = scmp.ne.s32.totalorder %s97, %s99
      %p106 = scmp.eq.s32.totalorder %s26, 1
      %p107 = por %p105, %p106
      %p108 = scmp.ne.s32.totalorder %s99, %s100
      %p109 = scmp.eq.s32.totalorder %s26, 0
      %p110 = por %p108, %p109
      %p111 = scmp.ne.s32.totalorder %s99, %s100
      %p112 = scmp.eq.s32.totalorder %s27, 1
      %p113 = por %p111, %p112
      %p115 = scmp.ne.s32.totalorder %s100, %s114
      %p116 = scmp.eq.s32.totalorder %s27, 0
      %p117 = por %p115, %p116
      %s119 = sadd.s32 %s118, 1
      %p122 = scmp.eq.s32.totalorder %s21, 1
      %p123 = scmp.ne.s32.totalorder %s118, %s120
      %p124 = scmp.eq.s32.totalorder %s21, 0
      %p125 = por %p123, %p124
      %p126 = scmp.ne.s32.totalorder %s118, %s120
      %p127 = scmp.eq.s32.totalorder %s26, 1
      %p128 = por %p126, %p127
      %p129 = scmp.ne.s32.totalorder %s120, %s121
      %p130 = scmp.eq.s32.totalorder %s26, 0
      %p131 = por %p129, %p130
      %p132 = scmp.ne.s32.totalorder %s120, %s121
      %p133 = scmp.eq.s32.totalorder %s27, 1
      %p134 = por %p132, %p133
      %p136 = scmp.ne.s32.totalorder %s121, %s135
      %p137 = scmp.eq.s32.totalorder %s27, 0
      %p138 = por %p136, %p137
      %s140 = sadd.s32 %s139, 1
      %p143 = scmp.eq.s32.totalorder %s21, 1
      %p144 = scmp.ne.s32.totalorder %s139, %s141
      %p145 = scmp.eq.s32.totalorder %s21, 0
      %p146 = por %p144, %p145
      %p147 = scmp.ne.s32.totalorder %s139, %s141
      %p148 = scmp.eq.s32.totalorder %s26, 1
      %p149 = por %p147, %p148
      %p150 = scmp.ne.s32.totalorder %s141, %s142
      %p151 = scmp.eq.s32.totalorder %s26, 0
      %p152 = por %p150, %p151
      %p153 = scmp.ne.s32.totalorder %s141, %s142
      %p154 = scmp.eq.s32.totalorder %s27, 1
      %p155 = por %p153, %p154
      %p157 = scmp.ne.s32.totalorder %s142, %s156
      %p158 = scmp.eq.s32.totalorder %s27, 0
      %p159 = por %p157, %p158
      %s161 = sadd.s32 %s160, 1
      %p164 = scmp.eq.s32.totalorder %s21, 1
      %p165 = scmp.ne.s32.totalorder %s160, %s162
      %p166 = scmp.eq.s32.totalorder %s21, 0
      %p167 = por %p165, %p166
      %p168 = scmp.ne.s32.totalorder %s160, %s162
      %p169 = scmp.eq.s32.totalorder %s26, 1
      %p170 = por %p168, %p169
      %p171 = scmp.ne.s32.totalorder %s162, %s163
      %p172 = scmp.eq.s32.totalorder %s26, 0
      %p173 = por %p171, %p172
      %p174 = scmp.ne.s32.totalorder %s162, %s163
      %p175 = scmp.eq.s32.totalorder %s27, 1
      %p176 = por %p174, %p175
      %p178 = scmp.ne.s32.totalorder %s163, %s177
      %p179 = scmp.eq.s32.totalorder %s27, 0
      %p180 = por %p178, %p179
      %s181 = ssub.s32 %s21, %s28
      %p182 = scmp.eq.s32.totalorder %s181, 0
      %s184 = sadd.s32 %s183, 1
      %s185 = scalar_select %p182, %s183, %s184
      %p188 = pneg %p182
      %p189 = scmp.eq.s32.totalorder %s21, 1
      %p190 = por %p188, %p189
      %p191 = scmp.ne.s32.totalorder %s183, %s186
      %p192 = scmp.eq.s32.totalorder %s21, 0
      %p193 = por %p191, %p192
      %p194 = scmp.ne.s32.totalorder %s183, %s186
      %p195 = scmp.eq.s32.totalorder %s26, 1
      %p196 = por %p194, %p195
      %p197 = scmp.ne.s32.totalorder %s186, %s187
      %p198 = scmp.eq.s32.totalorder %s26, 0
      %p199 = por %p197, %p198
      %p200 = scmp.ne.s32.totalorder %s186, %s187
      %p201 = scmp.eq.s32.totalorder %s27, 1
      %p202 = por %p200, %p201
      %p204 = scmp.ne.s32.totalorder %s187, %s203
      %p205 = scmp.eq.s32.totalorder %s27, 0
      %p206 = por %p204, %p205
      %p207 = scmp.le.s32.totalorder 1, %s21
      %p208 = scmp.lt.s32.totalorder %s21, 3
      %p209 = pnand %p207, %p208
      %p210 = pneg %p209
      // Predicated region
      $region9: #{tpu_custom_call.1} parent=5 // pred_check
        _
      $region10: #{tpu_custom_call.1} parent=5 // pred_check_branch
        %212 = sbr.rel (%p209) target = $region12
      $region11: #{tpu_custom_call.1} parent=5 // pred_region
        %s213 = ssub.s32 %s21, 1
        // Predicated region
        $region13: #{tpu_custom_call.1} parent=11 // pred_check
          %p214 = pneg %p68
        $region14: #{tpu_custom_call.1} parent=11 // pred_check_branch
          %216 = sbr.rel (%p214) target = $region16
        $region15: #{tpu_custom_call.1} parent=11 // pred_region
          %s218 = ssub.s32 4096, 4096
          %219 = vsyncadd [#allocation8], %s218
          %s220 = sshll.u32 [#allocation7], 4
          %s221 = int_to_ptr.vmem [resolvable:$true] %s220
          %226 = dma.hbm_to_vmem [thread:$0]  %s1, 4096, %s221, [#allocation8], 64, 64, 4
        $region16: #{tpu_custom_call.1} parent=11 // pred_fallthru
          _
        // Predicated region
        $region17: #{tpu_custom_call.1} parent=11 // pred_check
          %p227 = pneg %p89
        $region18: #{tpu_custom_call.1} parent=11 // pred_check_branch
          %229 = sbr.rel (%p227) target = $region20
        $region19: #{tpu_custom_call.1} parent=11 // pred_region
          _
        $region20: #{tpu_custom_call.1} parent=11 // pred_fallthru
          _
        // Predicated region
        $region21: #{tpu_custom_call.1} parent=11 // pred_check
          %p230 = pneg %p110
        $region22: #{tpu_custom_call.1} parent=11 // pred_check_branch
          %232 = sbr.rel (%p230) target = $region24
        $region23: #{tpu_custom_call.1} parent=11 // pred_region
          %s234 = ssub.s32 4096, 4096
          %235 = vsyncadd [#allocation8], %s234
          %s236 = sshll.u32 [#allocation9], 4
          %s237 = int_to_ptr.vmem [resolvable:$true] %s236
          %242 = dma.hbm_to_vmem [thread:$0]  %s3, 4096, %s237, [#allocation8], 64, 64, 4
        $region24: #{tpu_custom_call.1} parent=11 // pred_fallthru
          _
        // Predicated region
        $region25: #{tpu_custom_call.1} parent=11 // pred_check
          %p243 = pneg %p131
        $region26: #{tpu_custom_call.1} parent=11 // pred_check_branch
          %245 = sbr.rel (%p243) target = $region28
        $region27: #{tpu_custom_call.1} parent=11 // pred_region
          _
        $region28: #{tpu_custom_call.1} parent=11 // pred_fallthru
          _
        // Predicated region
        $region29: #{tpu_custom_call.1} parent=11 // pred_check
          %p246 = pneg %p152
        $region30: #{tpu_custom_call.1} parent=11 // pred_check_branch
          %248 = sbr.rel (%p246) target = $region32
        $region31: #{tpu_custom_call.1} parent=11 // pred_region
          %s250 = ssub.s32 1024, 1024
          %251 = vsyncadd [#allocation11], %s250
          %s252 = sshll.u32 [#allocation10], 4
          %s253 = int_to_ptr.vmem [resolvable:$true] %s252
          %258 = dma.hbm_to_vmem [thread:$0]  %s5, 1024, %s253, [#allocation11], 64, 64, 4
        $region32: #{tpu_custom_call.1} parent=11 // pred_fallthru
          _
        // Predicated region
        $region33: #{tpu_custom_call.1} parent=11 // pred_check
          %p259 = pneg %p173
        $region34: #{tpu_custom_call.1} parent=11 // pred_check_branch
          %261 = sbr.rel (%p259) target = $region36
        $region35: #{tpu_custom_call.1} parent=11 // pred_region
          _
        $region36: #{tpu_custom_call.1} parent=11 // pred_fallthru
          _
      $region12: #{tpu_custom_call.1} parent=5 // pred_fallthru
        _
      %p262 = scmp.lt.s32.totalorder %s21, 2
      // Predicated region
      $region37: #{tpu_custom_call.1} parent=5 // pred_check
        %p263 = pneg %p262
      $region38: #{tpu_custom_call.1} parent=5 // pred_check_branch
        %265 = sbr.rel (%p263) target = $region40
      $region39: #{tpu_custom_call.1} parent=5 // pred_region
        // Predicated region
        $region41: #{tpu_custom_call.1} parent=39 // pred_check
          %p266 = pneg %p41
        $region42: #{tpu_custom_call.1} parent=39 // pred_check_branch
          %268 = sbr.rel (%p266) target = $region44
        $region43: #{tpu_custom_call.1} parent=39 // pred_region
          %s269 = sand.u32 %s31, 1
          %s270 = scalar_lea.sflag [#allocation5], %s269
          %s271 = sand.u32 %s31, 1
          %s272 = smul.addr %s271, 8
          %s273 = scalar_lea.vmem [#allocation4], %s272
          %s275 = ssub.s32 128, 128
          %276 = vsyncadd %s270, %s275
          %s277 = smul.addr %s21, 2
          %s278 = smul.addr %s277, 64
          %s279 = scalar_lea.hbm %s0, %s278
          %s280 = sshll.u32 %s273, 4
          %s281 = int_to_ptr.vmem [resolvable:$true] %s280
          %286 = dma.hbm_to_vmem [thread:$0]  %s279, 128, %s281, %s270, 64, 64, 4
        $region44: #{tpu_custom_call.1} parent=39 // pred_fallthru
          _
      $region40: #{tpu_custom_call.1} parent=5 // pred_fallthru
        _
      %p287 = scmp.le.s32.totalorder 1, %s21
      %p288 = scmp.lt.s32.totalorder %s21, 3
      %p289 = pnand %p287, %p288
      %p290 = pneg %p289
      // Predicated region
      $region45: #{tpu_custom_call.1} parent=5 // pred_check
        _
      $region46: #{tpu_custom_call.1} parent=5 // pred_check_branch
        %292 = sbr.rel (%p289) target = $region48
      $region47: #{tpu_custom_call.1} parent=5 // pred_region
        %s293 = ssub.s32 %s21, 1
        %s294 = sand.u32 %s34, 1
        %s295 = scalar_lea.sflag [#allocation5], %s294
        %s296 = sand.u32 %s34, 1
        %s297 = smul.addr %s296, 8
        %s298 = scalar_lea.vmem [#allocation4], %s297
        // Predicated region
        $region49: #{tpu_custom_call.1} parent=47 // pred_check
          %p299 = pneg %p47
        $region50: #{tpu_custom_call.1} parent=47 // pred_check_branch
          %301 = sbr.rel (%p299) target = $region52
        $region51: #{tpu_custom_call.1} parent=47 // pred_region
          %302 = dma.done %s295, 128
        $region52: #{tpu_custom_call.1} parent=47 // pred_fallthru
          _
        // Predicated region
        $region53: #{tpu_custom_call.1} parent=47 // pred_check
          %p303 = pneg %p68
        $region54: #{tpu_custom_call.1} parent=47 // pred_check_branch
          %305 = sbr.rel (%p303) target = $region56
        $region55: #{tpu_custom_call.1} parent=47 // pred_region
          %306 = dma.done [#allocation8], 4096
        $region56: #{tpu_custom_call.1} parent=47 // pred_fallthru
          _
        // Predicated region
        $region57: #{tpu_custom_call.1} parent=47 // pred_check
          %p307 = pneg %p110
        $region58: #{tpu_custom_call.1} parent=47 // pred_check_branch
          %309 = sbr.rel (%p307) target = $region60
        $region59: #{tpu_custom_call.1} parent=47 // pred_region
          %310 = dma.done [#allocation8], 4096
        $region60: #{tpu_custom_call.1} parent=47 // pred_fallthru
          _
        // Predicated region
        $region61: #{tpu_custom_call.1} parent=47 // pred_check
          %p311 = pneg %p152
        $region62: #{tpu_custom_call.1} parent=47 // pred_check_branch
          %313 = sbr.rel (%p311) target = $region64
        $region63: #{tpu_custom_call.1} parent=47 // pred_region
          %314 = dma.done [#allocation11], 1024
        $region64: #{tpu_custom_call.1} parent=47 // pred_fallthru
          _
        %s315 = sand.u32 %s34, 1
        %s316 = scalar_lea.sflag [#allocation5], %s315
        %s317 = sand.u32 %s34, 1
        %s318 = smul.addr %s317, 8
        %s319 = scalar_lea.vmem [#allocation4], %s318
        %p320 = pneg %p47
        %p321 = pneg %p44
        %p322 = pneg %p68
        %p323 = pneg %p65
        %p324 = pneg %p89
        %p325 = pneg %p86
        %p326 = pneg %p110
        %p327 = pneg %p107
        %p328 = pneg %p131
        %p329 = pneg %p128
        %p330 = pneg %p152
        %p331 = pneg %p149
        %p332 = pneg %p173
        %p333 = pneg %p170
        %p334 = pneg %p199
        %p335 = pneg %p196
        %s336 = sand.u32 %s186, 1
        %s337 = scalar_lea.sflag [#allocation6], %s336
        %s338 = sand.u32 %s186, 1
        %s339 = smul.addr %s338, 8
        %s340 = scalar_lea.vmem [#allocation12], %s339
        %342 = vst [vmem:[#allocation2] sm:$0xff] 0.0
        %343 = vst [vmem:[#allocation3] sm:$0xff] 0.0
        %v344 = vld [vmem:[%s298] sm:$0xf]
        %v345 = vld [vmem:[%s298 + $0x4] sm:$0xf]
        %v346 = vunpack.c.l.bf16 %v344
        %v347 = vunpack.c.l.bf16 %v345
        %348 = vst [vmem:[#allocation2 + $0x8] sm:$0xff] %v346
        %349 = vst [vmem:[#allocation2 + $0x10] sm:$0xff] %v347
        %v350 = vld [vmem:[#allocation2 + $0x7] sm:$0xff]
        %v351 = vld [vmem:[#allocation2 + $0xf] sm:$0xff]
        %v352 = vld [vmem:[#allocation2 + $0x8] sm:$0xff]
        %v353 = vld [vmem:[#allocation2 + $0x10] sm:$0xff]
        %v354 = vpack.c.bf16 %v351, %v350
        %v355 = vpack.c.bf16 %v353, %v352
        %v356 = vld [vmem:[#allocation7] sm:$0xf]
        %v357 = vld [vmem:[#allocation7 + $0x4] sm:$0xf]
        %v358 = vld [vmem:[#allocation7 + $0x8] sm:$0xf]
        %v359 = vld [vmem:[#allocation7 + $0xc] sm:$0xf]
        %v360 = vld [vmem:[#allocation7 + $0x10] sm:$0xf]
        %v361 = vld [vmem:[#allocation7 + $0x14] sm:$0xf]
        %v362 = vld [vmem:[#allocation7 + $0x18] sm:$0xf]
        %v363 = vld [vmem:[#allocation7 + $0x1c] sm:$0xf]
        %v364 = vld [vmem:[#allocation7 + $0x20] sm:$0xf]
        %v365 = vld [vmem:[#allocation7 + $0x24] sm:$0xf]
        %v366 = vld [vmem:[#allocation7 + $0x28] sm:$0xf]
        %v367 = vld [vmem:[#allocation7 + $0x2c] sm:$0xf]
        %v368 = vld [vmem:[#allocation7 + $0x30] sm:$0xf]
        %v369 = vld [vmem:[#allocation7 + $0x34] sm:$0xf]
        %v370 = vld [vmem:[#allocation7 + $0x38] sm:$0xf]
        %v371 = vld [vmem:[#allocation7 + $0x3c] sm:$0xf]
        %v372 = vld [vmem:[#allocation7 + $0x40] sm:$0xf]
        %v373 = vld [vmem:[#allocation7 + $0x44] sm:$0xf]
        %v374 = vld [vmem:[#allocation7 + $0x48] sm:$0xf]
        %v375 = vld [vmem:[#allocation7 + $0x4c] sm:$0xf]
        %v376 = vld [vmem:[#allocation7 + $0x50] sm:$0xf]
        %v377 = vld [vmem:[#allocation7 + $0x54] sm:$0xf]
        %v378 = vld [vmem:[#allocation7 + $0x58] sm:$0xf]
        %v379 = vld [vmem:[#allocation7 + $0x5c] sm:$0xf]
        %v380 = vld [vmem:[#allocation7 + $0x60] sm:$0xf]
        %v381 = vld [vmem:[#allocation7 + $0x64] sm:$0xf]
        %v382 = vld [vmem:[#allocation7 + $0x68] sm:$0xf]
        %v383 = vld [vmem:[#allocation7 + $0x6c] sm:$0xf]
        %v384 = vld [vmem:[#allocation7 + $0x70] sm:$0xf]
        %v385 = vld [vmem:[#allocation7 + $0x74] sm:$0xf]
        %v386 = vld [vmem:[#allocation7 + $0x78] sm:$0xf]
        %v387 = vld [vmem:[#allocation7 + $0x7c] sm:$0xf]
        %v388 = vld [vmem:[%s2] sm:$0x1]
        %v390 = vlaneseq
        %v391 = vshrl.u32 %v390, 7
        %v392 = vsub.s32 0, %v391
        %v393 = vrot.slane %v388, %v392
        %v427 = vunpack.c.l.b16 %v356
        %v428 = vunpack.c.l.b16 %v357
        %v429 = vunpack.c.l.b16 %v358
        %v430 = vunpack.c.l.b16 %v359
        %v431 = vunpack.c.l.b16 %v360
        %v432 = vunpack.c.l.b16 %v361
        %v433 = vunpack.c.l.b16 %v362
        %v434 = vunpack.c.l.b16 %v363
        %v435 = vunpack.c.l.b16 %v364
        %v436 = vunpack.c.l.b16 %v365
        %v437 = vunpack.c.l.b16 %v366
        %v438 = vunpack.c.l.b16 %v367
        %v439 = vunpack.c.l.b16 %v368
        %v440 = vunpack.c.l.b16 %v369
        %v441 = vunpack.c.l.b16 %v370
        %v442 = vunpack.c.l.b16 %v371
        %v443 = vunpack.c.l.b16 %v372
        %v444 = vunpack.c.l.b16 %v373
        %v445 = vunpack.c.l.b16 %v374
        %v446 = vunpack.c.l.b16 %v375
        %v447 = vunpack.c.l.b16 %v376
        %v448 = vunpack.c.l.b16 %v377
        %v449 = vunpack.c.l.b16 %v378
        %v450 = vunpack.c.l.b16 %v379
        %v451 = vunpack.c.l.b16 %v380
        %v452 = vunpack.c.l.b16 %v381
        %v453 = vunpack.c.l.b16 %v382
        %v454 = vunpack.c.l.b16 %v383
        %v455 = vunpack.c.l.b16 %v384
        %v456 = vunpack.c.l.b16 %v385
        %v457 = vunpack.c.l.b16 %v386
        %v458 = vunpack.c.l.b16 %v387
        %v459 = vpack.c.b16 %v428, %v427
        %v460 = vpack.c.b16 %v430, %v429
        %v461 = vpack.c.b16 %v432, %v431
        %v462 = vpack.c.b16 %v434, %v433
        %v463 = vpack.c.b16 %v436, %v435
        %v464 = vpack.c.b16 %v438, %v437
        %v465 = vpack.c.b16 %v440, %v439
        %v466 = vpack.c.b16 %v442, %v441
        %v467 = vpack.c.b16 %v444, %v443
        %v468 = vpack.c.b16 %v446, %v445
        %v469 = vpack.c.b16 %v448, %v447
        %v470 = vpack.c.b16 %v450, %v449
        %v471 = vpack.c.b16 %v452, %v451
        %v472 = vpack.c.b16 %v454, %v453
        %v473 = vpack.c.b16 %v456, %v455
        %v474 = vpack.c.b16 %v458, %v457
        %491 = vmatprep.subr.bf16.mxu0 0
        %492 = vmatpush1.bf16.msra.mxu0 %v459
        %493 = vmatprep.subr.bf16.mxu0 0
        %494 = vmatpush1.bf16.msra.mxu0 %v460
        %495 = vmatprep.subr.bf16.mxu0 0
        %496 = vmatpush1.bf16.msra.mxu0 %v461
        %497 = vmatprep.subr.bf16.mxu0 0
        %498 = vmatpush1.bf16.msra.mxu0 %v462
        %499 = vmatprep.subr.bf16.mxu0 0
        %500 = vmatpush1.bf16.msra.mxu0 %v463
        %501 = vmatprep.subr.bf16.mxu0 0
        %502 = vmatpush1.bf16.msra.mxu0 %v464
        %503 = vmatprep.subr.bf16.mxu0 0
        %504 = vmatpush1.bf16.msra.mxu0 %v465
        %505 = vmatprep.subr.bf16.mxu0 0
        %506 = vmatpush1.bf16.msra.mxu0 %v466
        %507 = vmatprep.subr.bf16.mxu0 0
        %508 = vmatpush1.bf16.msra.mxu0 %v467
        %509 = vmatprep.subr.bf16.mxu0 0
        %510 = vmatpush1.bf16.msra.mxu0 %v468
        %511 = vmatprep.subr.bf16.mxu0 0
        %512 = vmatpush1.bf16.msra.mxu0 %v469
        %513 = vmatprep.subr.bf16.mxu0 0
        %514 = vmatpush1.bf16.msra.mxu0 %v470
        %515 = vmatprep.subr.bf16.mxu0 0
        %516 = vmatpush1.bf16.msra.mxu0 %v471
        %517 = vmatprep.subr.bf16.mxu0 0
        %518 = vmatpush1.bf16.msra.mxu0 %v472
        %519 = vmatprep.subr.bf16.mxu0 0
        %520 = vmatpush1.bf16.msra.mxu0 %v473
        %521 = vmatprep.subr.bf16.mxu0 0
        %522 = vmatpush1.bf16.msra.mxu0 %v474
        %523 = vmatprep.mubr.bf16.mxu0 %v355
        %524 = vmatmul.mubr.bf16.gmra.mrb[0].mxu0 %v354
        %v525 = vpop.f32.mrb[0].mxu0
        %v526 = vadd.f32 %v393, %v525
        %v527 = vpop.f32.mrb[0].mxu0
        %v528 = vpop.f32.mrb[0].mxu0
        %v529 = vadd.f32 %v393, %v528
        %v530 = vpop.f32.mrb[0].mxu0
        %531 = vdwg.mxu0
        %v532 = vmax.f32 %v526, 0.0
        %v533 = vmax.f32 %v529, 0.0
        %534 = vst [vmem:[#allocation3 + $0x8] sm:$0xff] %v532
        %535 = vst [vmem:[#allocation3 + $0x10] sm:$0xff] %v533
        %v536 = vld [vmem:[#allocation3 + $0x7] sm:$0xff]
        %v537 = vld [vmem:[#allocation3 + $0xf] sm:$0xff]
        %v538 = vld [vmem:[#allocation3 + $0x8] sm:$0xff]
        %v539 = vld [vmem:[#allocation3 + $0x10] sm:$0xff]
        %v540 = vpack.c.bf16 %v537, %v536
        %v541 = vpack.c.bf16 %v539, %v538
        %v542 = vld [vmem:[#allocation9] sm:$0xf]
        %v543 = vld [vmem:[#allocation9 + $0x4] sm:$0xf]
        %v544 = vld [vmem:[#allocation9 + $0x8] sm:$0xf]
        %v545 = vld [vmem:[#allocation9 + $0xc] sm:$0xf]
        %v546 = vld [vmem:[#allocation9 + $0x10] sm:$0xf]
        %v547 = vld [vmem:[#allocation9 + $0x14] sm:$0xf]
        %v548 = vld [vmem:[#allocation9 + $0x18] sm:$0xf]
        %v549 = vld [vmem:[#allocation9 + $0x1c] sm:$0xf]
        %v550 = vld [vmem:[#allocation9 + $0x20] sm:$0xf]
        %v551 = vld [vmem:[#allocation9 + $0x24] sm:$0xf]
        %v552 = vld [vmem:[#allocation9 + $0x28] sm:$0xf]
        %v553 = vld [vmem:[#allocation9 + $0x2c] sm:$0xf]
        %v554 = vld [vmem:[#allocation9 + $0x30] sm:$0xf]
        %v555 = vld [vmem:[#allocation9 + $0x34] sm:$0xf]
        %v556 = vld [vmem:[#allocation9 + $0x38] sm:$0xf]
        %v557 = vld [vmem:[#allocation9 + $0x3c] sm:$0xf]
        %v558 = vld [vmem:[#allocation9 + $0x40] sm:$0xf]
        %v559 = vld [vmem:[#allocation9 + $0x44] sm:$0xf]
        %v560 = vld [vmem:[#allocation9 + $0x48] sm:$0xf]
        %v561 = vld [vmem:[#allocation9 + $0x4c] sm:$0xf]
        %v562 = vld [vmem:[#allocation9 + $0x50] sm:$0xf]
        %v563 = vld [vmem:[#allocation9 + $0x54] sm:$0xf]
        %v564 = vld [vmem:[#allocation9 + $0x58] sm:$0xf]
        %v565 = vld [vmem:[#allocation9 + $0x5c] sm:$0xf]
        %v566 = vld [vmem:[#allocation9 + $0x60] sm:$0xf]
        %v567 = vld [vmem:[#allocation9 + $0x64] sm:$0xf]
        %v568 = vld [vmem:[#allocation9 + $0x68] sm:$0xf]
        %v569 = vld [vmem:[#allocation9 + $0x6c] sm:$0xf]
        %v570 = vld [vmem:[#allocation9 + $0x70] sm:$0xf]
        %v571 = vld [vmem:[#allocation9 + $0x74] sm:$0xf]
        %v572 = vld [vmem:[#allocation9 + $0x78] sm:$0xf]
        %v573 = vld [vmem:[#allocation9 + $0x7c] sm:$0xf]
        %v574 = vld [vmem:[%s4] sm:$0x1]
        %v576 = vlaneseq
        %v577 = vshrl.u32 %v576, 7
        %v578 = vsub.s32 0, %v577
        %v579 = vrot.slane %v574, %v578
        %v613 = vunpack.c.l.b16 %v542
        %v614 = vunpack.c.l.b16 %v543
        %v615 = vunpack.c.l.b16 %v544
        %v616 = vunpack.c.l.b16 %v545
        %v617 = vunpack.c.l.b16 %v546
        %v618 = vunpack.c.l.b16 %v547
        %v619 = vunpack.c.l.b16 %v548
        %v620 = vunpack.c.l.b16 %v549
        %v621 = vunpack.c.l.b16 %v550
        %v622 = vunpack.c.l.b16 %v551
        %v623 = vunpack.c.l.b16 %v552
        %v624 = vunpack.c.l.b16 %v553
        %v625 = vunpack.c.l.b16 %v554
        %v626 = vunpack.c.l.b16 %v555
        %v627 = vunpack.c.l.b16 %v556
        %v628 = vunpack.c.l.b16 %v557
        %v629 = vunpack.c.l.b16 %v558
        %v630 = vunpack.c.l.b16 %v559
        %v631 = vunpack.c.l.b16 %v560
        %v632 = vunpack.c.l.b16 %v561
        %v633 = vunpack.c.l.b16 %v562
        %v634 = vunpack.c.l.b16 %v563
        %v635 = vunpack.c.l.b16 %v564
        %v636 = vunpack.c.l.b16 %v565
        %v637 = vunpack.c.l.b16 %v566
        %v638 = vunpack.c.l.b16 %v567
        %v639 = vunpack.c.l.b16 %v568
        %v640 = vunpack.c.l.b16 %v569
        %v641 = vunpack.c.l.b16 %v570
        %v642 = vunpack.c.l.b16 %v571
        %v643 = vunpack.c.l.b16 %v572
        %v644 = vunpack.c.l.b16 %v573
        %v645 = vpack.c.b16 %v614, %v613
        %v646 = vpack.c.b16 %v616, %v615
        %v647 = vpack.c.b16 %v618, %v617
        %v648 = vpack.c.b16 %v620, %v619
        %v649 = vpack.c.b16 %v622, %v621
        %v650 = vpack.c.b16 %v624, %v623
        %v651 = vpack.c.b16 %v626, %v625
        %v652 = vpack.c.b16 %v628, %v627
        %v653 = vpack.c.b16 %v630, %v629
        %v654 = vpack.c.b16 %v632, %v631
        %v655 = vpack.c.b16 %v634, %v633
        %v656 = vpack.c.b16 %v636, %v635
        %v657 = vpack.c.b16 %v638, %v637
        %v658 = vpack.c.b16 %v640, %v639
        %v659 = vpack.c.b16 %v642, %v641
        %v660 = vpack.c.b16 %v644, %v643
        %677 = vmatprep.subr.bf16.mxu0 0
        %678 = vmatpush1.bf16.msra.mxu0 %v645
        %679 = vmatprep.subr.bf16.mxu0 0
        %680 = vmatpush1.bf16.msra.mxu0 %v646
        %681 = vmatprep.subr.bf16.mxu0 0
        %682 = vmatpush1.bf16.msra.mxu0 %v647
        %683 = vmatprep.subr.bf16.mxu0 0
        %684 = vmatpush1.bf16.msra.mxu0 %v648
        %685 = vmatprep.subr.bf16.mxu0 0
        %686 = vmatpush1.bf16.msra.mxu0 %v649
        %687 = vmatprep.subr.bf16.mxu0 0
        %688 = vmatpush1.bf16.msra.mxu0 %v650
        %689 = vmatprep.subr.bf16.mxu0 0
        %690 = vmatpush1.bf16.msra.mxu0 %v651
        %691 = vmatprep.subr.bf16.mxu0 0
        %692 = vmatpush1.bf16.msra.mxu0 %v652
        %693 = vmatprep.subr.bf16.mxu0 0
        %694 = vmatpush1.bf16.msra.mxu0 %v653
        %695 = vmatprep.subr.bf16.mxu0 0
        %696 = vmatpush1.bf16.msra.mxu0 %v654
        %697 = vmatprep.subr.bf16.mxu0 0
        %698 = vmatpush1.bf16.msra.mxu0 %v655
        %699 = vmatprep.subr.bf16.mxu0 0
        %700 = vmatpush1.bf16.msra.mxu0 %v656
        %701 = vmatprep.subr.bf16.mxu0 0
        %702 = vmatpush1.bf16.msra.mxu0 %v657
        %703 = vmatprep.subr.bf16.mxu0 0
        %704 = vmatpush1.bf16.msra.mxu0 %v658
        %705 = vmatprep.subr.bf16.mxu0 0
        %706 = vmatpush1.bf16.msra.mxu0 %v659
        %707 = vmatprep.subr.bf16.mxu0 0
        %708 = vmatpush1.bf16.msra.mxu0 %v660
        %709 = vmatprep.mubr.bf16.mxu0 %v541
        %710 = vmatmul.mubr.bf16.gmra.mrb[0].mxu0 %v540
        %v711 = vpop.f32.mrb[0].mxu0
        %v712 = vadd.f32 %v579, %v711
        %v713 = vpop.f32.mrb[0].mxu0
        %v714 = vpop.f32.mrb[0].mxu0
        %v715 = vadd.f32 %v579, %v714
        %v716 = vpop.f32.mrb[0].mxu0
        %717 = vdwg.mxu0
        %v718 = vmax.f32 %v712, 0.0
        %v719 = vmax.f32 %v715, 0.0
        %v720 = vld [vmem:[#allocation2 + $0x8] sm:$0xff]
        %v721 = vld [vmem:[#allocation2 + $0x10] sm:$0xff]
        %v722 = vpack.c.bf16 %v721, %v720
        %v723 = vld [vmem:[#allocation10] sm:$0xf]
        %v724 = vld [vmem:[#allocation10 + $0x4] sm:$0xf]
        %v725 = vld [vmem:[#allocation10 + $0x8] sm:$0xf]
        %v726 = vld [vmem:[#allocation10 + $0xc] sm:$0xf]
        %v727 = vld [vmem:[#allocation10 + $0x10] sm:$0xf]
        %v728 = vld [vmem:[#allocation10 + $0x14] sm:$0xf]
        %v729 = vld [vmem:[#allocation10 + $0x18] sm:$0xf]
        %v730 = vld [vmem:[#allocation10 + $0x1c] sm:$0xf]
        %v731 = vld [vmem:[#allocation10 + $0x20] sm:$0xf]
        %v732 = vld [vmem:[#allocation10 + $0x24] sm:$0xf]
        %v733 = vld [vmem:[#allocation10 + $0x28] sm:$0xf]
        %v734 = vld [vmem:[#allocation10 + $0x2c] sm:$0xf]
        %v735 = vld [vmem:[#allocation10 + $0x30] sm:$0xf]
        %v736 = vld [vmem:[#allocation10 + $0x34] sm:$0xf]
        %v737 = vld [vmem:[#allocation10 + $0x38] sm:$0xf]
        %v738 = vld [vmem:[#allocation10 + $0x3c] sm:$0xf]
        %v739 = vld [vmem:[%s6] sm:$0x1]
        %v741 = vlaneseq
        %v742 = vshrl.u32 %v741, 7
        %v743 = vsub.s32 0, %v742
        %v744 = vrot.slane %v739, %v743
        %v762 = vunpack.c.l.b16 %v723
        %v763 = vunpack.c.l.b16 %v724
        %v764 = vunpack.c.l.b16 %v725
        %v765 = vunpack.c.l.b16 %v726
        %v766 = vunpack.c.l.b16 %v727
        %v767 = vunpack.c.l.b16 %v728
        %v768 = vunpack.c.l.b16 %v729
        %v769 = vunpack.c.l.b16 %v730
        %v770 = vunpack.c.l.b16 %v731
        %v771 = vunpack.c.l.b16 %v732
        %v772 = vunpack.c.l.b16 %v733
        %v773 = vunpack.c.l.b16 %v734
        %v774 = vunpack.c.l.b16 %v735
        %v775 = vunpack.c.l.b16 %v736
        %v776 = vunpack.c.l.b16 %v737
        %v777 = vunpack.c.l.b16 %v738
        %v778 = vpack.c.b16 %v763, %v762
        %v779 = vpack.c.b16 %v765, %v764
        %v780 = vpack.c.b16 %v767, %v766
        %v781 = vpack.c.b16 %v769, %v768
        %v782 = vpack.c.b16 %v771, %v770
        %v783 = vpack.c.b16 %v773, %v772
        %v784 = vpack.c.b16 %v775, %v774
        %v785 = vpack.c.b16 %v777, %v776
        %794 = vmatprep.subr.bf16.mxu0 0
        %795 = vmatpush1.bf16.msra.mxu0 %v778
        %796 = vmatprep.subr.bf16.mxu0 0
        %797 = vmatpush1.bf16.msra.mxu0 %v779
        %798 = vmatprep.subr.bf16.mxu0 0
        %799 = vmatpush1.bf16.msra.mxu0 %v780
        %800 = vmatprep.subr.bf16.mxu0 0
        %801 = vmatpush1.bf16.msra.mxu0 %v781
        %802 = vmatprep.subr.bf16.mxu0 0
        %803 = vmatpush1.bf16.msra.mxu0 %v782
        %804 = vmatprep.subr.bf16.mxu0 0
        %805 = vmatpush1.bf16.msra.mxu0 %v783
        %806 = vmatprep.subr.bf16.mxu0 0
        %807 = vmatpush1.bf16.msra.mxu0 %v784
        %808 = vmatprep.subr.bf16.mxu0 0
        %809 = vmatpush1.bf16.msra.mxu0 %v785
        %810 = vmatprep.subr.bf16.mxu0 0
        %811 = vmatpush1.bf16.msra.mxu0 0
        %812 = vmatprep.subr.bf16.mxu0 0
        %813 = vmatpush1.bf16.msra.mxu0 0
        %814 = vmatprep.subr.bf16.mxu0 0
        %815 = vmatpush1.bf16.msra.mxu0 0
        %816 = vmatprep.subr.bf16.mxu0 0
        %817 = vmatpush1.bf16.msra.mxu0 0
        %818 = vmatprep.subr.bf16.mxu0 0
        %819 = vmatpush1.bf16.msra.mxu0 0
        %820 = vmatprep.subr.bf16.mxu0 0
        %821 = vmatpush1.bf16.msra.mxu0 0
        %822 = vmatprep.subr.bf16.mxu0 0
        %823 = vmatpush1.bf16.msra.mxu0 0
        %824 = vmatprep.subr.bf16.mxu0 0
        %825 = vmatpush1.bf16.msra.mxu0 0
        %826 = vmatprep.mubr.bf16.mxu0 0
        %827 = vmatmul.mubr.bf16.gmra.mrb[0].mxu0 %v722
        %v828 = vpop.f32.mrb[0].mxu0
        %v829 = vadd.f32 %v744, %v828
        %v830 = vpop.f32.mrb[0].mxu0
        %v831 = vpop.f32.mrb[0].mxu0
        %v832 = vadd.f32 %v744, %v831
        %v833 = vpop.f32.mrb[0].mxu0
        %834 = vdwg.mxu0
        %v835 = vadd.f32 %v718, %v829
        %v836 = vadd.f32 %v719, %v832
        %v837 = vmax.f32 %v835, 0.0
        %v838 = vmax.f32 %v836, 0.0
        %839 = vst [vmem:[#allocation2 + $0x8] sm:$0xff] %v837
        %840 = vst [vmem:[#allocation2 + $0x10] sm:$0xff] %v838
        %v841 = vld [vmem:[#allocation2 + $0x6] sm:$0xff]
        %v842 = vld [vmem:[#allocation2 + $0xe] sm:$0xff]
        %v843 = vld [vmem:[#allocation2 + $0x8] sm:$0xff]
        %v844 = vld [vmem:[#allocation2 + $0x10] sm:$0xff]
        %v845 = vpack.c.bf16 %v842, %v841
        %v846 = vpack.c.bf16 %v844, %v843
        %s847 = scalar_lea.vmem [#allocation7], 128
        %v848 = vld [vmem:[%s847] sm:$0xf]
        %v849 = vld [vmem:[%s847 + $0x4] sm:$0xf]
        %v850 = vld [vmem:[%s847 + $0x8] sm:$0xf]
        %v851 = vld [vmem:[%s847 + $0xc] sm:$0xf]
        %v852 = vld [vmem:[%s847 + $0x10] sm:$0xf]
        %v853 = vld [vmem:[%s847 + $0x14] sm:$0xf]
        %v854 = vld [vmem:[%s847 + $0x18] sm:$0xf]
        %v855 = vld [vmem:[%s847 + $0x1c] sm:$0xf]
        %v856 = vld [vmem:[%s847 + $0x20] sm:$0xf]
        %v857 = vld [vmem:[%s847 + $0x24] sm:$0xf]
        %v858 = vld [vmem:[%s847 + $0x28] sm:$0xf]
        %v859 = vld [vmem:[%s847 + $0x2c] sm:$0xf]
        %v860 = vld [vmem:[%s847 + $0x30] sm:$0xf]
        %v861 = vld [vmem:[%s847 + $0x34] sm:$0xf]
        %v862 = vld [vmem:[%s847 + $0x38] sm:$0xf]
        %v863 = vld [vmem:[%s847 + $0x3c] sm:$0xf]
        %v864 = vld [vmem:[%s847 + $0x40] sm:$0xf]
        %v865 = vld [vmem:[%s847 + $0x44] sm:$0xf]
        %v866 = vld [vmem:[%s847 + $0x48] sm:$0xf]
        %v867 = vld [vmem:[%s847 + $0x4c] sm:$0xf]
        %v868 = vld [vmem:[%s847 + $0x50] sm:$0xf]
        %v869 = vld [vmem:[%s847 + $0x54] sm:$0xf]
        %v870 = vld [vmem:[%s847 + $0x58] sm:$0xf]
        %v871 = vld [vmem:[%s847 + $0x5c] sm:$0xf]
        %v872 = vld [vmem:[%s847 + $0x60] sm:$0xf]
        %v873 = vld [vmem:[%s847 + $0x64] sm:$0xf]
        %v874 = vld [vmem:[%s847 + $0x68] sm:$0xf]
        %v875 = vld [vmem:[%s847 + $0x6c] sm:$0xf]
        %v876 = vld [vmem:[%s847 + $0x70] sm:$0xf]
        %v877 = vld [vmem:[%s847 + $0x74] sm:$0xf]
        %v878 = vld [vmem:[%s847 + $0x78] sm:$0xf]
        %v879 = vld [vmem:[%s847 + $0x7c] sm:$0xf]
        %s880 = scalar_lea.vmem %s2, 1
        %v881 = vld [vmem:[%s880] sm:$0x1]
        %v883 = vlaneseq
        %v884 = vshrl.u32 %v883, 7
        %v885 = vsub.s32 0, %v884
        %v886 = vrot.slane %v881, %v885
        %v920 = vunpack.c.l.b16 %v848
        %v921 = vunpack.c.l.b16 %v849
        %v922 = vunpack.c.l.b16 %v850
        %v923 = vunpack.c.l.b16 %v851
        %v924 = vunpack.c.l.b16 %v852
        %v925 = vunpack.c.l.b16 %v853
        %v926 = vunpack.c.l.b16 %v854
        %v927 = vunpack.c.l.b16 %v855
        %v928 = vunpack.c.l.b16 %v856
        %v929 = vunpack.c.l.b16 %v857
        %v930 = vunpack.c.l.b16 %v858
        %v931 = vunpack.c.l.b16 %v859
        %v932 = vunpack.c.l.b16 %v860
        %v933 = vunpack.c.l.b16 %v861
        %v934 = vunpack.c.l.b16 %v862
        %v935 = vunpack.c.l.b16 %v863
        %v936 = vunpack.c.l.b16 %v864
        %v937 = vunpack.c.l.b16 %v865
        %v938 = vunpack.c.l.b16 %v866
        %v939 = vunpack.c.l.b16 %v867
        %v940 = vunpack.c.l.b16 %v868
        %v941 = vunpack.c.l.b16 %v869
        %v942 = vunpack.c.l.b16 %v870
        %v943 = vunpack.c.l.b16 %v871
        %v944 = vunpack.c.l.b16 %v872
        %v945 = vunpack.c.l.b16 %v873
        %v946 = vunpack.c.l.b16 %v874
        %v947 = vunpack.c.l.b16 %v875
        %v948 = vunpack.c.l.b16 %v876
        %v949 = vunpack.c.l.b16 %v877
        %v950 = vunpack.c.l.b16 %v878
        %v951 = vunpack.c.l.b16 %v879
        %v952 = vpack.c.b16 %v921, %v920
        %v953 = vpack.c.b16 %v923, %v922
        %v954 = vpack.c.b16 %v925, %v924
        %v955 = vpack.c.b16 %v927, %v926
        %v956 = vpack.c.b16 %v929, %v928
        %v957 = vpack.c.b16 %v931, %v930
        %v958 = vpack.c.b16 %v933, %v932
        %v959 = vpack.c.b16 %v935, %v934
        %v960 = vpack.c.b16 %v937, %v936
        %v961 = vpack.c.b16 %v939, %v938
        %v962 = vpack.c.b16 %v941, %v940
        %v963 = vpack.c.b16 %v943, %v942
        %v964 = vpack.c.b16 %v945, %v944
        %v965 = vpack.c.b16 %v947, %v946
        %v966 = vpack.c.b16 %v949, %v948
        %v967 = vpack.c.b16 %v951, %v950
        %984 = vmatprep.subr.bf16.mxu0 0
        %985 = vmatpush1.bf16.msra.mxu0 %v952
        %986 = vmatprep.subr.bf16.mxu0 0
        %987 = vmatpush1.bf16.msra.mxu0 %v953
        %988 = vmatprep.subr.bf16.mxu0 0
        %989 = vmatpush1.bf16.msra.mxu0 %v954
        %990 = vmatprep.subr.bf16.mxu0 0
        %991 = vmatpush1.bf16.msra.mxu0 %v955
        %992 = vmatprep.subr.bf16.mxu0 0
        %993 = vmatpush1.bf16.msra.mxu0 %v956
        %994 = vmatprep.subr.bf16.mxu0 0
        %995 = vmatpush1.bf16.msra.mxu0 %v957
        %996 = vmatprep.subr.bf16.mxu0 0
        %997 = vmatpush1.bf16.msra.mxu0 %v958
        %998 = vmatprep.subr.bf16.mxu0 0
        %999 = vmatpush1.bf16.msra.mxu0 %v959
        %1000 = vmatprep.subr.bf16.mxu0 0
        %1001 = vmatpush1.bf16.msra.mxu0 %v960
        %1002 = vmatprep.subr.bf16.mxu0 0
        %1003 = vmatpush1.bf16.msra.mxu0 %v961
        %1004 = vmatprep.subr.bf16.mxu0 0
        %1005 = vmatpush1.bf16.msra.mxu0 %v962
        %1006 = vmatprep.subr.bf16.mxu0 0
        %1007 = vmatpush1.bf16.msra.mxu0 %v963
        %1008 = vmatprep.subr.bf16.mxu0 0
        %1009 = vmatpush1.bf16.msra.mxu0 %v964
        %1010 = vmatprep.subr.bf16.mxu0 0
        %1011 = vmatpush1.bf16.msra.mxu0 %v965
        %1012 = vmatprep.subr.bf16.mxu0 0
        %1013 = vmatpush1.bf16.msra.mxu0 %v966
        %1014 = vmatprep.subr.bf16.mxu0 0
        %1015 = vmatpush1.bf16.msra.mxu0 %v967
        %1016 = vmatprep.mubr.bf16.mxu0 %v846
        %1017 = vmatmul.mubr.bf16.gmra.mrb[0].mxu0 %v845
        %v1018 = vpop.f32.mrb[0].mxu0
        %v1019 = vadd.f32 %v886, %v1018
        %v1020 = vpop.f32.mrb[0].mxu0
        %v1021 = vpop.f32.mrb[0].mxu0
        %v1022 = vadd.f32 %v886, %v1021
        %v1023 = vpop.f32.mrb[0].mxu0
        %1024 = vdwg.mxu0
        %v1025 = vmax.f32 %v1019, 0.0
        %v1026 = vmax.f32 %v1022, 0.0
        %1027 = vst [vmem:[#allocation3 + $0x8] sm:$0xff] %v1025
        %1028 = vst [vmem:[#allocation3 + $0x10] sm:$0xff] %v1026
        %v1029 = vld [vmem:[#allocation3 + $0x6] sm:$0xff]
        %v1030 = vld [vmem:[#allocation3 + $0xe] sm:$0xff]
        %v1031 = vld [vmem:[#allocation3 + $0x8] sm:$0xff]
        %v1032 = vld [vmem:[#allocation3 + $0x10] sm:$0xff]
        %v1033 = vpack.c.bf16 %v1030, %v1029
        %v1034 = vpack.c.bf16 %v1032, %v1031
        %s1035 = scalar_lea.vmem [#allocation9], 128
        %v1036 = vld [vmem:[%s1035] sm:$0xf]
        %v1037 = vld [vmem:[%s1035 + $0x4] sm:$0xf]
        %v1038 = vld [vmem:[%s1035 + $0x8] sm:$0xf]
        %v1039 = vld [vmem:[%s1035 + $0xc] sm:$0xf]
        %v1040 = vld [vmem:[%s1035 + $0x10] sm:$0xf]
        %v1041 = vld [vmem:[%s1035 + $0x14] sm:$0xf]
        %v1042 = vld [vmem:[%s1035 + $0x18] sm:$0xf]
        %v1043 = vld [vmem:[%s1035 + $0x1c] sm:$0xf]
        %v1044 = vld [vmem:[%s1035 + $0x20] sm:$0xf]
        %v1045 = vld [vmem:[%s1035 + $0x24] sm:$0xf]
        %v1046 = vld [vmem:[%s1035 + $0x28] sm:$0xf]
        %v1047 = vld [vmem:[%s1035 + $0x2c] sm:$0xf]
        %v1048 = vld [vmem:[%s1035 + $0x30] sm:$0xf]
        %v1049 = vld [vmem:[%s1035 + $0x34] sm:$0xf]
        %v1050 = vld [vmem:[%s1035 + $0x38] sm:$0xf]
        %v1051 = vld [vmem:[%s1035 + $0x3c] sm:$0xf]
        %v1052 = vld [vmem:[%s1035 + $0x40] sm:$0xf]
        %v1053 = vld [vmem:[%s1035 + $0x44] sm:$0xf]
        %v1054 = vld [vmem:[%s1035 + $0x48] sm:$0xf]
        %v1055 = vld [vmem:[%s1035 + $0x4c] sm:$0xf]
        %v1056 = vld [vmem:[%s1035 + $0x50] sm:$0xf]
        %v1057 = vld [vmem:[%s1035 + $0x54] sm:$0xf]
        %v1058 = vld [vmem:[%s1035 + $0x58] sm:$0xf]
        %v1059 = vld [vmem:[%s1035 + $0x5c] sm:$0xf]
        %v1060 = vld [vmem:[%s1035 + $0x60] sm:$0xf]
        %v1061 = vld [vmem:[%s1035 + $0x64] sm:$0xf]
        %v1062 = vld [vmem:[%s1035 + $0x68] sm:$0xf]
        %v1063 = vld [vmem:[%s1035 + $0x6c] sm:$0xf]
        %v1064 = vld [vmem:[%s1035 + $0x70] sm:$0xf]
        %v1065 = vld [vmem:[%s1035 + $0x74] sm:$0xf]
        %v1066 = vld [vmem:[%s1035 + $0x78] sm:$0xf]
        %v1067 = vld [vmem:[%s1035 + $0x7c] sm:$0xf]
        %s1068 = scalar_lea.vmem %s4, 1
        %v1069 = vld [vmem:[%s1068] sm:$0x1]
        %v1071 = vlaneseq
        %v1072 = vshrl.u32 %v1071, 7
        %v1073 = vsub.s32 0, %v1072
        %v1074 = vrot.slane %v1069, %v1073
        %v1108 = vunpack.c.l.b16 %v1036
        %v1109 = vunpack.c.l.b16 %v1037
        %v1110 = vunpack.c.l.b16 %v1038
        %v1111 = vunpack.c.l.b16 %v1039
        %v1112 = vunpack.c.l.b16 %v1040
        %v1113 = vunpack.c.l.b16 %v1041
        %v1114 = vunpack.c.l.b16 %v1042
        %v1115 = vunpack.c.l.b16 %v1043
        %v1116 = vunpack.c.l.b16 %v1044
        %v1117 = vunpack.c.l.b16 %v1045
        %v1118 = vunpack.c.l.b16 %v1046
        %v1119 = vunpack.c.l.b16 %v1047
        %v1120 = vunpack.c.l.b16 %v1048
        %v1121 = vunpack.c.l.b16 %v1049
        %v1122 = vunpack.c.l.b16 %v1050
        %v1123 = vunpack.c.l.b16 %v1051
        %v1124 = vunpack.c.l.b16 %v1052
        %v1125 = vunpack.c.l.b16 %v1053
        %v1126 = vunpack.c.l.b16 %v1054
        %v1127 = vunpack.c.l.b16 %v1055
        %v1128 = vunpack.c.l.b16 %v1056
        %v1129 = vunpack.c.l.b16 %v1057
        %v1130 = vunpack.c.l.b16 %v1058
        %v1131 = vunpack.c.l.b16 %v1059
        %v1132 = vunpack.c.l.b16 %v1060
        %v1133 = vunpack.c.l.b16 %v1061
        %v1134 = vunpack.c.l.b16 %v1062
        %v1135 = vunpack.c.l.b16 %v1063
        %v1136 = vunpack.c.l.b16 %v1064
        %v1137 = vunpack.c.l.b16 %v1065
        %v1138 = vunpack.c.l.b16 %v1066
        %v1139 = vunpack.c.l.b16 %v1067
        %v1140 = vpack.c.b16 %v1109, %v1108
        %v1141 = vpack.c.b16 %v1111, %v1110
        %v1142 = vpack.c.b16 %v1113, %v1112
        %v1143 = vpack.c.b16 %v1115, %v1114
        %v1144 = vpack.c.b16 %v1117, %v1116
        %v1145 = vpack.c.b16 %v1119, %v1118
        %v1146 = vpack.c.b16 %v1121, %v1120
        %v1147 = vpack.c.b16 %v1123, %v1122
        %v1148 = vpack.c.b16 %v1125, %v1124
        %v1149 = vpack.c.b16 %v1127, %v1126
        %v1150 = vpack.c.b16 %v1129, %v1128
        %v1151 = vpack.c.b16 %v1131, %v1130
        %v1152 = vpack.c.b16 %v1133, %v1132
        %v1153 = vpack.c.b16 %v1135, %v1134
        %v1154 = vpack.c.b16 %v1137, %v1136
        %v1155 = vpack.c.b16 %v1139, %v1138
        %1172 = vmatprep.subr.bf16.mxu0 0
        %1173 = vmatpush1.bf16.msra.mxu0 %v1140
        %1174 = vmatprep.subr.bf16.mxu0 0
        %1175 = vmatpush1.bf16.msra.mxu0 %v1141
        %1176 = vmatprep.subr.bf16.mxu0 0
        %1177 = vmatpush1.bf16.msra.mxu0 %v1142
        %1178 = vmatprep.subr.bf16.mxu0 0
        %1179 = vmatpush1.bf16.msra.mxu0 %v1143
        %1180 = vmatprep.subr.bf16.mxu0 0
        %1181 = vmatpush1.bf16.msra.mxu0 %v1144
        %1182 = vmatprep.subr.bf16.mxu0 0
        %1183 = vmatpush1.bf16.msra.mxu0 %v1145
        %1184 = vmatprep.subr.bf16.mxu0 0
        %1185 = vmatpush1.bf16.msra.mxu0 %v1146
        %1186 = vmatprep.subr.bf16.mxu0 0
        %1187 = vmatpush1.bf16.msra.mxu0 %v1147
        %1188 = vmatprep.subr.bf16.mxu0 0
        %1189 = vmatpush1.bf16.msra.mxu0 %v1148
        %1190 = vmatprep.subr.bf16.mxu0 0
        %1191 = vmatpush1.bf16.msra.mxu0 %v1149
        %1192 = vmatprep.subr.bf16.mxu0 0
        %1193 = vmatpush1.bf16.msra.mxu0 %v1150
        %1194 = vmatprep.subr.bf16.mxu0 0
        %1195 = vmatpush1.bf16.msra.mxu0 %v1151
        %1196 = vmatprep.subr.bf16.mxu0 0
        %1197 = vmatpush1.bf16.msra.mxu0 %v1152
        %1198 = vmatprep.subr.bf16.mxu0 0
        %1199 = vmatpush1.bf16.msra.mxu0 %v1153
        %1200 = vmatprep.subr.bf16.mxu0 0
        %1201 = vmatpush1.bf16.msra.mxu0 %v1154
        %1202 = vmatprep.subr.bf16.mxu0 0
        %1203 = vmatpush1.bf16.msra.mxu0 %v1155
        %1204 = vmatprep.mubr.bf16.mxu0 %v1034
        %1205 = vmatmul.mubr.bf16.gmra.mrb[0].mxu0 %v1033
        %v1206 = vpop.f32.mrb[0].mxu0
        %v1207 = vadd.f32 %v1074, %v1206
        %v1208 = vpop.f32.mrb[0].mxu0
        %v1209 = vpop.f32.mrb[0].mxu0
        %v1210 = vadd.f32 %v1074, %v1209
        %v1211 = vpop.f32.mrb[0].mxu0
        %1212 = vdwg.mxu0
        %v1213 = vmax.f32 %v1207, 0.0
        %v1214 = vmax.f32 %v1210, 0.0
        %v1215 = vld [vmem:[#allocation2 + $0x8] sm:$0xff]
        %v1216 = vld [vmem:[#allocation2 + $0x10] sm:$0xff]
        %v1217 = vadd.f32 %v1213, %v1215
        %v1218 = vadd.f32 %v1214, %v1216
        %v1219 = vmax.f32 %v1217, 0.0
        %v1220 = vmax.f32 %v1218, 0.0
        %v1221 = vpack.c.bf16 %v1220, %v1219
        %v1223 = vunpack.c.l.b16 %v1221
        %v1224 = vunpack.c.h.b16 %v1221
        %v1225 = vpack.c.b16 %v1223, %v1223
        %v1226 = vpack.c.b16 %v1224, %v1224
        %1229 = vst [vmem:[%s340] sm:$0xf] %v1225
        %1230 = vst [vmem:[%s340 + $0x4] sm:$0xf] %v1226
        %s1231 = sand.u32 %s186, 1
        %s1232 = scalar_lea.sflag [#allocation6], %s1231
        %s1233 = sand.u32 %s186, 1
        %s1234 = smul.addr %s1233, 8
        %s1235 = scalar_lea.vmem [#allocation12], %s1234
        // Predicated region
        $region65: #{tpu_custom_call.1} parent=47 // pred_check
          %p1236 = pneg %p196
        $region66: #{tpu_custom_call.1} parent=47 // pred_check_branch
          %1238 = sbr.rel (%p1236) target = $region68
        $region67: #{tpu_custom_call.1} parent=47 // pred_region
          %s1240 = ssub.s32 128, 128
          %1241 = vsyncadd %s1232, %s1240
          %s1242 = smul.addr %s26, 2
          %s1243 = smul.addr %s1242, 64
          %s1244 = scalar_lea.hbm %s7, %s1243
          %s1245 = sshll.u32 %s1235, 4
          %s1246 = int_to_ptr.vmem [resolvable:$true] %s1245
          %1251 = dma.vmem_to_hbm [thread:$0]  %s1246, 128, %s1244, %s1232, 64, 64, 4
        $region68: #{tpu_custom_call.1} parent=47 // pred_fallthru
          _
      $region48: #{tpu_custom_call.1} parent=5 // pred_fallthru
        _
      %p1252 = scmp.le.s32.totalorder 2, %s21
      // Predicated region
      $region69: #{tpu_custom_call.1} parent=5 // pred_check
        %p1253 = pneg %p1252
      $region70: #{tpu_custom_call.1} parent=5 // pred_check_branch
        %1255 = sbr.rel (%p1253) target = $region72
      $region71: #{tpu_custom_call.1} parent=5 // pred_region
        %s1256 = ssub.s32 %s21, 2
        // Predicated region
        $region73: #{tpu_custom_call.1} parent=71 // pred_check
          %p1257 = pneg %p202
        $region74: #{tpu_custom_call.1} parent=71 // pred_check_branch
          %1259 = sbr.rel (%p1257) target = $region76
        $region75: #{tpu_custom_call.1} parent=71 // pred_region
          %s1260 = sand.u32 %s187, 1
          %s1261 = scalar_lea.sflag [#allocation6], %s1260
          %s1262 = sand.u32 %s187, 1
          %s1263 = smul.addr %s1262, 8
          %s1264 = scalar_lea.vmem [#allocation12], %s1263
          %1265 = dma.done %s1261, 128
        $region76: #{tpu_custom_call.1} parent=71 // pred_fallthru
          _
      $region72: #{tpu_custom_call.1} parent=5 // pred_fallthru
        _
    $region6: #{tpu_custom_call.1} parent=1 // loop_footer
      %s25 = sadd.s32 1, %s21
    $region7: #{tpu_custom_call.1} parent=1 // loop_footer_branch
      %20 = sbr.rel target = $region3
    $region8: #{tpu_custom_call.1} parent=1 // loop_exit
      _
    %1266 = vsyncpa [#allocation5], 1
    %s1267 = scalar_lea.sflag [#allocation5], 1
    %1268 = vsyncpa %s1267, 1
    %1269 = vsyncpa [#allocation8], 1
    %1270 = vsyncpa [#allocation11], 1
    %1271 = vsyncpa [#allocation6], 1
    %s1272 = scalar_lea.sflag [#allocation6], 1
    %1273 = vsyncpa %s1272, 1

</llo_original>
